<compile_context>
chip_gen: v7x
topology: tpu7x:2x2x1
jax: 0.10.0
libtpu: 0.0.40
codegen_flags: <defaults>
</compile_context>

<pallas_src>
import jax
import jax.numpy as jnp
import numpy as np
from jax.experimental import pallas as pl
from jax.experimental.pallas import tpu as pltpu


# ----------------------------------------------------------------------------
# Fused Pallas kernel: wavefront over L stacked LSTM layers + final Linear
# ----------------------------------------------------------------------------
def make_fused_lstm_kernel(num_layers, seq_len, hidden_size):
    L, T, H = num_layers, seq_len, hidden_size

    def kernel(x_ref, wih0_ref, b0_ref, wrec_ref, *refs):
        # refs = (b_1, ..., b_{L-1}, wfc, bfc, out)
        out_ref = refs[-1]
        bfc_ref = refs[-2]
        wfc_ref = refs[-3]
        b_upper_refs = refs[: L - 1]

        B = x_ref.shape[1]                        # padded batch (sublane mult)
        D = x_ref.shape[2]

        # ---- Hoisted layer-0 input projection for all T steps (one matmul) --
        x2d = x_ref[...].reshape(T * B, D).astype(jnp.bfloat16)
        gx0 = (
            jnp.dot(x2d, wih0_ref[...], preferred_element_type=jnp.float32)
            + b0_ref[...]
        ).reshape(T, B, 4 * H)                    # f32, stays in VMEM/vregs

        wrec = wrec_ref[...]                      # (L*H, L*4H) bf16, VMEM-res.
        # Hoist upper-layer bias broadcasts out of the wave loop.
        b_up = [jnp.broadcast_to(r[...], (B, 4 * H)) for r in b_upper_refs]

        h = [jnp.zeros((B, H), jnp.float32) for _ in range(L)]
        c = [jnp.zeros((B, H), jnp.float32) for _ in range(L)]

        # ---- Wavefront recurrence: wave w -> layer l does step (w - l) ------
        for w in range(T + L - 1):                # statically unrolled
            # One fused recurrent matmul per wave; uses start-of-wave states,
            # so W_hh_l sees h_l(t-1) and W_ih_l sees h_{l-1}(t) correctly.
            z = jnp.concatenate(h, axis=1).astype(jnp.bfloat16)   # (B, L*H)
            g_all = jnp.dot(z, wrec, preferred_element_type=jnp.float32)

            for l in range(L):
                t = w - l
                if t < 0 or t >= T:               # layer inactive this wave
                    continue
                g_l = g_all[:, l * 4 * H:(l + 1) * 4 * H]          # (B, 4H)
                gates = g_l + (gx0[t] if l == 0 else b_up[l - 1])
                sig = jax.nn.sigmoid(gates)       # full-width EUP op
                th = jnp.tanh(gates)              # full-width EUP op
                i_g = sig[:, 0 * H:1 * H]
                f_g = sig[:, 1 * H:2 * H]
                g_g = th[:, 2 * H:3 * H]
                o_g = sig[:, 3 * H:4 * H]
                c[l] = f_g * c[l] + i_g * g_g
                h[l] = o_g * jnp.tanh(c[l])

        # ---- Fused final Linear on last layer's last hidden state -----------
        out_ref[...] = (
            jnp.dot(h[L - 1].astype(jnp.bfloat16), wfc_ref[...],
                    preferred_element_type=jnp.float32)
            + bfc_ref[...]
        ).astype(out_ref.dtype)

    return kernel


# ----------------------------------------------------------------------------
# Parameter prep: torch-shaped f32 params -> kernel-ready (bf16 weights,
# fused block recurrent matrix, combined biases).
# ----------------------------------------------------------------------------
def prepare_kernel_params(params, wdtype=jnp.bfloat16):
    lstm = params["lstm"]                         # (w_ih, w_hh, b_ih, b_hh)
    L = len(lstm)
    H = lstm[0][1].shape[1]

    wih0 = lstm[0][0].T.astype(wdtype)            # (D, 4H)
    b0 = (lstm[0][2] + lstm[0][3]).reshape(1, 4 * H).astype(jnp.float32)

    # Fused recurrent block matrix W_rec (L*H, L*4H):
    #   row-block l, col-block l   -> W_hh_l^T
    #   row-block l, col-block l+1 -> W_ih_{l+1}^T
    wrec = jnp.zeros((L * H, L * 4 * H), jnp.float32)
    for l in range(L):
        wrec = wrec.at[l * H:(l + 1) * H,
                       l * 4 * H:(l + 1) * 4 * H].set(lstm[l][1].T)
        if l + 1 < L:
            wrec = wrec.at[l * H:(l + 1) * H,
                           (l + 1) * 4 * H:(l + 2) * 4 * H].set(lstm[l + 1][0].T)
    wrec = wrec.astype(wdtype)

    b_upper = [
        (lstm[l][2] + lstm[l][3]).reshape(1, 4 * H).astype(jnp.float32)
        for l in range(1, L)
    ]
    fc_w = params["fc_w"].T.astype(wdtype)        # (H, O)
    fc_b = params["fc_b"].reshape(1, -1).astype(jnp.float32)
    return {"wih0": wih0, "b0": b0, "wrec": wrec, "b_upper": b_upper,
            "fc_w": fc_w, "fc_b": fc_b}


# ----------------------------------------------------------------------------
# Wrapper: one jitted graph (transpose + pad + fused kernel + slice)
# ----------------------------------------------------------------------------
@jax.jit
def simple_lstm_forward(x, kp):
    """x: (B, T, input_size), batch_first like the PyTorch module -> (B, O)."""
    B, T, _ = x.shape
    H = kp["wih0"].shape[1] // 4
    L = len(kp["b_upper"]) + 1
    O = kp["fc_w"].shape[1]

    # Pad batch to a full sublane multiple and go time-major so every per-step
    # time index inside the kernel is a cheap leading-dim slice.
    B_pad = max(8, -(-B // 8) * 8)
    x_tm = jnp.transpose(x, (1, 0, 2))            # (T, B, D)
    if B_pad != B:
        x_tm = jnp.pad(x_tm, ((0, 0), (0, B_pad - B), (0, 0)))

    args = [x_tm, kp["wih0"], kp["b0"], kp["wrec"],
            *kp["b_upper"], kp["fc_w"], kp["fc_b"]]

    out = pl.pallas_call(
        make_fused_lstm_kernel(L, T, H),
        out_shape=jax.ShapeDtypeStruct((B_pad, O), jnp.float32),
        in_specs=[pl.BlockSpec(memory_space=pltpu.MemorySpace.VMEM)] * len(args),
        out_specs=pl.BlockSpec(memory_space=pltpu.MemorySpace.VMEM),
    )(*args)
    return out[:B]


# ----------------------------------------------------------------------------
# Pure-JAX f32 reference (matches PyTorch nn.LSTM + nn.Linear semantics)
# ----------------------------------------------------------------------------
def reference_forward(x, params):
    layer_in = jnp.transpose(x, (1, 0, 2))        # (T, B, D)
    for (w_ih, w_hh, b_ih, b_hh) in params["lstm"]:
        H = w_hh.shape[1]
        T, B, _ = layer_in.shape
        h = jnp.zeros((B, H), jnp.float32)
        c = jnp.zeros((B, H), jnp.float32)
        outs = []
        for t in range(T):
            gates = layer_in[t] @ w_ih.T + h @ w_hh.T + b_ih + b_hh
            i_g = jax.nn.sigmoid(gates[:, 0 * H:1 * H])
            f_g = jax.nn.sigmoid(gates[:, 1 * H:2 * H])
            g_g = jnp.tanh(gates[:, 2 * H:3 * H])
            o_g = jax.nn.sigmoid(gates[:, 3 * H:4 * H])
            c = f_g * c + i_g * g_g
            h = o_g * jnp.tanh(c)
            outs.append(h)
        layer_in = jnp.stack(outs, axis=0)
    return layer_in[-1] @ params["fc_w"].T + params["fc_b"]


# ----------------------------------------------------------------------------
# Deterministic parameter init (nn.LSTM / nn.Linear shapes, gate order i,f,g,o)
# ----------------------------------------------------------------------------
def init_params(key, input_size, hidden_size, num_layers, output_size):
    lim = 1.0 / np.sqrt(hidden_size)
    lstm = []
    for layer in range(num_layers):
        d_in = input_size if layer == 0 else hidden_size
        key, k1, k2, k3, k4 = jax.random.split(key, 5)
        w_ih = jax.random.uniform(k1, (4 * hidden_size, d_in), jnp.float32, -lim, lim)
        w_hh = jax.random.uniform(k2, (4 * hidden_size, hidden_size), jnp.float32, -lim, lim)
        b_ih = jax.random.uniform(k3, (4 * hidden_size,), jnp.float32, -lim, lim)
        b_hh = jax.random.uniform(k4, (4 * hidden_size,), jnp.float32, -lim, lim)
        lstm.append((w_ih, w_hh, b_ih, b_hh))
    key, k5, k6 = jax.random.split(key, 3)
    fc_w = jax.random.uniform(k5, (output_size, hidden_size), jnp.float32, -lim, lim)
    fc_b = jax.random.uniform(k6, (output_size,), jnp.float32, -lim, lim)
    return {"lstm": lstm, "fc_w": fc_w, "fc_b": fc_b}


# ----------------------------------------------------------------------------
if __name__ == "__main__":
    batch, seq_len = 2, 8
    input_size, hidden_size, num_layers, output_size = 16, 32, 2, 8

    key = jax.random.PRNGKey(0)
    key, kx = jax.random.split(key)
    x = jax.random.normal(kx, (batch, seq_len, input_size), jnp.float32)
    params = init_params(key, input_size, hidden_size, num_layers, output_size)
    kparams = prepare_kernel_params(params)

    out = simple_lstm_forward(x, kparams)
    out = jax.block_until_ready(out)

    ref = reference_forward(x, params)
    # bf16 matmul operands (f32 accumulation) -> relaxed tolerance vs f32 ref.
    np.testing.assert_allclose(np.asarray(out), np.asarray(ref),
                               rtol=5e-2, atol=2e-2)

    assert out.shape == (batch, output_size)
    print("KERNEL_OK")
</pallas_src>

<mosaic_0001>
module attributes {stable_mosaic.version = 11 : i64} {
  func.func @kernel(%arg0: memref<8x8x16xf32, #tpu.memory_space<vmem>>, %arg1: memref<16x128xbf16, #tpu.memory_space<vmem>>, %arg2: memref<1x128xf32, #tpu.memory_space<vmem>>, %arg3: memref<64x256xbf16, #tpu.memory_space<vmem>>, %arg4: memref<1x128xf32, #tpu.memory_space<vmem>>, %arg5: memref<32x8xbf16, #tpu.memory_space<vmem>>, %arg6: memref<1x8xf32, #tpu.memory_space<vmem>>, %arg7: memref<8x8xf32, #tpu.memory_space<vmem>>) attributes {dimension_semantics = [], scalar_prefetch = 0 : i64, scratch_operands = 0 : i64, tpu.core_type = #tpu.core_type<tc>} {
    %c0 = arith.constant 0 : index
    %c0_0 = arith.constant 0 : index
    %c0_1 = arith.constant 0 : index
    %0 = vector.load %arg0[%c0, %c0_0, %c0_1] : memref<8x8x16xf32, #tpu.memory_space<vmem>>, vector<8x8x16xf32>
    %1 = vector.shape_cast %0 : vector<8x8x16xf32> to vector<64x16xf32>
    %2 = arith.truncf %1 : vector<64x16xf32> to vector<64x16xbf16>
    %c0_2 = arith.constant 0 : index
    %c0_3 = arith.constant 0 : index
    %3 = vector.load %arg1[%c0_2, %c0_3] : memref<16x128xbf16, #tpu.memory_space<vmem>>, vector<16x128xbf16>
    %cst = arith.constant dense<0.000000e+00> : vector<64x128xf32>
    %4 = tpu.matmul %2, %3, %cst {dimension_numbers = #tpu.dot_dimension_numbers<[1], [0], [0], [1], [0, 0, 1, 1], [], []>} : vector<64x16xbf16>, vector<16x128xbf16>, vector<64x128xf32> -> vector<64x128xf32>
    %c0_4 = arith.constant 0 : index
    %c0_5 = arith.constant 0 : index
    %5 = vector.load %arg2[%c0_4, %c0_5] : memref<1x128xf32, #tpu.memory_space<vmem>>, vector<1x128xf32>
    %6 = vector.broadcast %5 : vector<1x128xf32> to vector<64x128xf32>
    %7 = arith.addf %4, %6 : vector<64x128xf32>
    %8 = vector.shape_cast %7 : vector<64x128xf32> to vector<8x8x128xf32>
    %c0_6 = arith.constant 0 : index
    %c0_7 = arith.constant 0 : index
    %9 = vector.load %arg3[%c0_6, %c0_7] : memref<64x256xbf16, #tpu.memory_space<vmem>>, vector<64x256xbf16>
    %c0_8 = arith.constant 0 : index
    %c0_9 = arith.constant 0 : index
    %10 = vector.load %arg4[%c0_8, %c0_9] : memref<1x128xf32, #tpu.memory_space<vmem>>, vector<1x128xf32>
    %11 = vector.shape_cast %10 : vector<1x128xf32> to vector<1x128xf32>
    %12 = vector.broadcast %11 : vector<1x128xf32> to vector<8x128xf32>
    %cst_10 = arith.constant 0.000000e+00 : f32
    %13 = vector.broadcast %cst_10 : f32 to vector<8x32xf32>
    %cst_11 = arith.constant 0.000000e+00 : f32
    %14 = vector.broadcast %cst_11 : f32 to vector<8x32xf32>
    %cst_12 = arith.constant 0.000000e+00 : f32
    %15 = vector.broadcast %cst_12 : f32 to vector<8x32xf32>
    %cst_13 = arith.constant 0.000000e+00 : f32
    %16 = vector.broadcast %cst_13 : f32 to vector<8x32xf32>
    %17 = tpu.concatenate %13, %14 in 1 : vector<8x32xf32>, vector<8x32xf32> -> vector<8x64xf32>
    %18 = arith.truncf %17 : vector<8x64xf32> to vector<8x64xbf16>
    %cst_14 = arith.constant dense<0.000000e+00> : vector<8x256xf32>
    %19 = tpu.matmul %18, %9, %cst_14 {dimension_numbers = #tpu.dot_dimension_numbers<[1], [0], [0], [1], [0, 0, 1, 1], [], []>} : vector<8x64xbf16>, vector<64x256xbf16>, vector<8x256xf32> -> vector<8x256xf32>
    %20 = vector.extract_strided_slice %19 {offsets = [0, 0], sizes = [8, 128], strides = [1, 1]} : vector<8x256xf32> to vector<8x128xf32>
    %21 = vector.extract_strided_slice %8 {offsets = [0, 0, 0], sizes = [1, 8, 128], strides = [1, 1, 1]} : vector<8x8x128xf32> to vector<1x8x128xf32>
    %22 = vector.shape_cast %21 : vector<1x8x128xf32> to vector<8x128xf32>
    %23 = arith.addf %20, %22 : vector<8x128xf32>
    %24 = arith.negf %23 : vector<8x128xf32>
    %25 = math.exp %24 : vector<8x128xf32>
    %cst_15 = arith.constant 1.000000e+00 : f32
    %26 = vector.broadcast %cst_15 : f32 to vector<8x128xf32>
    %27 = arith.addf %26, %25 : vector<8x128xf32>
    %28 = arith.divf %26, %27 : vector<8x128xf32>
    %29 = math.tanh %23 : vector<8x128xf32>
    %30 = vector.extract_strided_slice %28 {offsets = [0, 0], sizes = [8, 32], strides = [1, 1]} : vector<8x128xf32> to vector<8x32xf32>
    %31 = vector.extract_strided_slice %28 {offsets = [0, 32], sizes = [8, 32], strides = [1, 1]} : vector<8x128xf32> to vector<8x32xf32>
    %32 = vector.extract_strided_slice %29 {offsets = [0, 64], sizes = [8, 32], strides = [1, 1]} : vector<8x128xf32> to vector<8x32xf32>
    %33 = vector.extract_strided_slice %28 {offsets = [0, 96], sizes = [8, 32], strides = [1, 1]} : vector<8x128xf32> to vector<8x32xf32>
    %34 = arith.mulf %31, %15 : vector<8x32xf32>
    %35 = arith.mulf %30, %32 : vector<8x32xf32>
    %36 = arith.addf %34, %35 : vector<8x32xf32>
    %37 = math.tanh %36 : vector<8x32xf32>
    %38 = arith.mulf %33, %37 : vector<8x32xf32>
    %39 = tpu.concatenate %38, %14 in 1 : vector<8x32xf32>, vector<8x32xf32> -> vector<8x64xf32>
    %40 = arith.truncf %39 : vector<8x64xf32> to vector<8x64xbf16>
    %cst_16 = arith.constant dense<0.000000e+00> : vector<8x256xf32>
    %41 = tpu.matmul %40, %9, %cst_16 {dimension_numbers = #tpu.dot_dimension_numbers<[1], [0], [0], [1], [0, 0, 1, 1], [], []>} : vector<8x64xbf16>, vector<64x256xbf16>, vector<8x256xf32> -> vector<8x256xf32>
    %42 = vector.extract_strided_slice %41 {offsets = [0, 0], sizes = [8, 128], strides = [1, 1]} : vector<8x256xf32> to vector<8x128xf32>
    %43 = vector.extract_strided_slice %8 {offsets = [1, 0, 0], sizes = [1, 8, 128], strides = [1, 1, 1]} : vector<8x8x128xf32> to vector<1x8x128xf32>
    %44 = vector.shape_cast %43 : vector<1x8x128xf32> to vector<8x128xf32>
    %45 = arith.addf %42, %44 : vector<8x128xf32>
    %46 = arith.negf %45 : vector<8x128xf32>
    %47 = math.exp %46 : vector<8x128xf32>
    %cst_17 = arith.constant 1.000000e+00 : f32
    %48 = vector.broadcast %cst_17 : f32 to vector<8x128xf32>
    %49 = arith.addf %48, %47 : vector<8x128xf32>
    %50 = arith.divf %48, %49 : vector<8x128xf32>
    %51 = math.tanh %45 : vector<8x128xf32>
    %52 = vector.extract_strided_slice %50 {offsets = [0, 0], sizes = [8, 32], strides = [1, 1]} : vector<8x128xf32> to vector<8x32xf32>
    %53 = vector.extract_strided_slice %50 {offsets = [0, 32], sizes = [8, 32], strides = [1, 1]} : vector<8x128xf32> to vector<8x32xf32>
    %54 = vector.extract_strided_slice %51 {offsets = [0, 64], sizes = [8, 32], strides = [1, 1]} : vector<8x128xf32> to vector<8x32xf32>
    %55 = vector.extract_strided_slice %50 {offsets = [0, 96], sizes = [8, 32], strides = [1, 1]} : vector<8x128xf32> to vector<8x32xf32>
    %56 = arith.mulf %53, %36 : vector<8x32xf32>
    %57 = arith.mulf %52, %54 : vector<8x32xf32>
    %58 = arith.addf %56, %57 : vector<8x32xf32>
    %59 = math.tanh %58 : vector<8x32xf32>
    %60 = arith.mulf %55, %59 : vector<8x32xf32>
    %61 = vector.extract_strided_slice %41 {offsets = [0, 128], sizes = [8, 128], strides = [1, 1]} : vector<8x256xf32> to vector<8x128xf32>
    %62 = arith.addf %61, %12 : vector<8x128xf32>
    %63 = arith.negf %62 : vector<8x128xf32>
    %64 = math.exp %63 : vector<8x128xf32>
    %cst_18 = arith.constant 1.000000e+00 : f32
    %65 = vector.broadcast %cst_18 : f32 to vector<8x128xf32>
    %66 = arith.addf %65, %64 : vector<8x128xf32>
    %67 = arith.divf %65, %66 : vector<8x128xf32>
    %68 = math.tanh %62 : vector<8x128xf32>
    %69 = vector.extract_strided_slice %67 {offsets = [0, 0], sizes = [8, 32], strides = [1, 1]} : vector<8x128xf32> to vector<8x32xf32>
    %70 = vector.extract_strided_slice %67 {offsets = [0, 32], sizes = [8, 32], strides = [1, 1]} : vector<8x128xf32> to vector<8x32xf32>
    %71 = vector.extract_strided_slice %68 {offsets = [0, 64], sizes = [8, 32], strides = [1, 1]} : vector<8x128xf32> to vector<8x32xf32>
    %72 = vector.extract_strided_slice %67 {offsets = [0, 96], sizes = [8, 32], strides = [1, 1]} : vector<8x128xf32> to vector<8x32xf32>
    %73 = arith.mulf %70, %16 : vector<8x32xf32>
    %74 = arith.mulf %69, %71 : vector<8x32xf32>
    %75 = arith.addf %73, %74 : vector<8x32xf32>
    %76 = math.tanh %75 : vector<8x32xf32>
    %77 = arith.mulf %72, %76 : vector<8x32xf32>
    %78 = tpu.concatenate %60, %77 in 1 : vector<8x32xf32>, vector<8x32xf32> -> vector<8x64xf32>
    %79 = arith.truncf %78 : vector<8x64xf32> to vector<8x64xbf16>
    %cst_19 = arith.constant dense<0.000000e+00> : vector<8x256xf32>
    %80 = tpu.matmul %79, %9, %cst_19 {dimension_numbers = #tpu.dot_dimension_numbers<[1], [0], [0], [1], [0, 0, 1, 1], [], []>} : vector<8x64xbf16>, vector<64x256xbf16>, vector<8x256xf32> -> vector<8x256xf32>
    %81 = vector.extract_strided_slice %80 {offsets = [0, 0], sizes = [8, 128], strides = [1, 1]} : vector<8x256xf32> to vector<8x128xf32>
    %82 = vector.extract_strided_slice %8 {offsets = [2, 0, 0], sizes = [1, 8, 128], strides = [1, 1, 1]} : vector<8x8x128xf32> to vector<1x8x128xf32>
    %83 = vector.shape_cast %82 : vector<1x8x128xf32> to vector<8x128xf32>
    %84 = arith.addf %81, %83 : vector<8x128xf32>
    %85 = arith.negf %84 : vector<8x128xf32>
    %86 = math.exp %85 : vector<8x128xf32>
    %cst_20 = arith.constant 1.000000e+00 : f32
    %87 = vector.broadcast %cst_20 : f32 to vector<8x128xf32>
    %88 = arith.addf %87, %86 : vector<8x128xf32>
    %89 = arith.divf %87, %88 : vector<8x128xf32>
    %90 = math.tanh %84 : vector<8x128xf32>
    %91 = vector.extract_strided_slice %89 {offsets = [0, 0], sizes = [8, 32], strides = [1, 1]} : vector<8x128xf32> to vector<8x32xf32>
    %92 = vector.extract_strided_slice %89 {offsets = [0, 32], sizes = [8, 32], strides = [1, 1]} : vector<8x128xf32> to vector<8x32xf32>
    %93 = vector.extract_strided_slice %90 {offsets = [0, 64], sizes = [8, 32], strides = [1, 1]} : vector<8x128xf32> to vector<8x32xf32>
    %94 = vector.extract_strided_slice %89 {offsets = [0, 96], sizes = [8, 32], strides = [1, 1]} : vector<8x128xf32> to vector<8x32xf32>
    %95 = arith.mulf %92, %58 : vector<8x32xf32>
    %96 = arith.mulf %91, %93 : vector<8x32xf32>
    %97 = arith.addf %95, %96 : vector<8x32xf32>
    %98 = math.tanh %97 : vector<8x32xf32>
    %99 = arith.mulf %94, %98 : vector<8x32xf32>
    %100 = vector.extract_strided_slice %80 {offsets = [0, 128], sizes = [8, 128], strides = [1, 1]} : vector<8x256xf32> to vector<8x128xf32>
    %101 = arith.addf %100, %12 : vector<8x128xf32>
    %102 = arith.negf %101 : vector<8x128xf32>
    %103 = math.exp %102 : vector<8x128xf32>
    %cst_21 = arith.constant 1.000000e+00 : f32
    %104 = vector.broadcast %cst_21 : f32 to vector<8x128xf32>
    %105 = arith.addf %104, %103 : vector<8x128xf32>
    %106 = arith.divf %104, %105 : vector<8x128xf32>
    %107 = math.tanh %101 : vector<8x128xf32>
    %108 = vector.extract_strided_slice %106 {offsets = [0, 0], sizes = [8, 32], strides = [1, 1]} : vector<8x128xf32> to vector<8x32xf32>
    %109 = vector.extract_strided_slice %106 {offsets = [0, 32], sizes = [8, 32], strides = [1, 1]} : vector<8x128xf32> to vector<8x32xf32>
    %110 = vector.extract_strided_slice %107 {offsets = [0, 64], sizes = [8, 32], strides = [1, 1]} : vector<8x128xf32> to vector<8x32xf32>
    %111 = vector.extract_strided_slice %106 {offsets = [0, 96], sizes = [8, 32], strides = [1, 1]} : vector<8x128xf32> to vector<8x32xf32>
    %112 = arith.mulf %109, %75 : vector<8x32xf32>
    %113 = arith.mulf %108, %110 : vector<8x32xf32>
    %114 = arith.addf %112, %113 : vector<8x32xf32>
    %115 = math.tanh %114 : vector<8x32xf32>
    %116 = arith.mulf %111, %115 : vector<8x32xf32>
    %117 = tpu.concatenate %99, %116 in 1 : vector<8x32xf32>, vector<8x32xf32> -> vector<8x64xf32>
    %118 = arith.truncf %117 : vector<8x64xf32> to vector<8x64xbf16>
    %cst_22 = arith.constant dense<0.000000e+00> : vector<8x256xf32>
    %119 = tpu.matmul %118, %9, %cst_22 {dimension_numbers = #tpu.dot_dimension_numbers<[1], [0], [0], [1], [0, 0, 1, 1], [], []>} : vector<8x64xbf16>, vector<64x256xbf16>, vector<8x256xf32> -> vector<8x256xf32>
    %120 = vector.extract_strided_slice %119 {offsets = [0, 0], sizes = [8, 128], strides = [1, 1]} : vector<8x256xf32> to vector<8x128xf32>
    %121 = vector.extract_strided_slice %8 {offsets = [3, 0, 0], sizes = [1, 8, 128], strides = [1, 1, 1]} : vector<8x8x128xf32> to vector<1x8x128xf32>
    %122 = vector.shape_cast %121 : vector<1x8x128xf32> to vector<8x128xf32>
    %123 = arith.addf %120, %122 : vector<8x128xf32>
    %124 = arith.negf %123 : vector<8x128xf32>
    %125 = math.exp %124 : vector<8x128xf32>
    %cst_23 = arith.constant 1.000000e+00 : f32
    %126 = vector.broadcast %cst_23 : f32 to vector<8x128xf32>
    %127 = arith.addf %126, %125 : vector<8x128xf32>
    %128 = arith.divf %126, %127 : vector<8x128xf32>
    %129 = math.tanh %123 : vector<8x128xf32>
    %130 = vector.extract_strided_slice %128 {offsets = [0, 0], sizes = [8, 32], strides = [1, 1]} : vector<8x128xf32> to vector<8x32xf32>
    %131 = vector.extract_strided_slice %128 {offsets = [0, 32], sizes = [8, 32], strides = [1, 1]} : vector<8x128xf32> to vector<8x32xf32>
    %132 = vector.extract_strided_slice %129 {offsets = [0, 64], sizes = [8, 32], strides = [1, 1]} : vector<8x128xf32> to vector<8x32xf32>
    %133 = vector.extract_strided_slice %128 {offsets = [0, 96], sizes = [8, 32], strides = [1, 1]} : vector<8x128xf32> to vector<8x32xf32>
    %134 = arith.mulf %131, %97 : vector<8x32xf32>
    %135 = arith.mulf %130, %132 : vector<8x32xf32>
    %136 = arith.addf %134, %135 : vector<8x32xf32>
    %137 = math.tanh %136 : vector<8x32xf32>
    %138 = arith.mulf %133, %137 : vector<8x32xf32>
    %139 = vector.extract_strided_slice %119 {offsets = [0, 128], sizes = [8, 128], strides = [1, 1]} : vector<8x256xf32> to vector<8x128xf32>
    %140 = arith.addf %139, %12 : vector<8x128xf32>
    %141 = arith.negf %140 : vector<8x128xf32>
    %142 = math.exp %141 : vector<8x128xf32>
    %cst_24 = arith.constant 1.000000e+00 : f32
    %143 = vector.broadcast %cst_24 : f32 to vector<8x128xf32>
    %144 = arith.addf %143, %142 : vector<8x128xf32>
    %145 = arith.divf %143, %144 : vector<8x128xf32>
    %146 = math.tanh %140 : vector<8x128xf32>
    %147 = vector.extract_strided_slice %145 {offsets = [0, 0], sizes = [8, 32], strides = [1, 1]} : vector<8x128xf32> to vector<8x32xf32>
    %148 = vector.extract_strided_slice %145 {offsets = [0, 32], sizes = [8, 32], strides = [1, 1]} : vector<8x128xf32> to vector<8x32xf32>
    %149 = vector.extract_strided_slice %146 {offsets = [0, 64], sizes = [8, 32], strides = [1, 1]} : vector<8x128xf32> to vector<8x32xf32>
    %150 = vector.extract_strided_slice %145 {offsets = [0, 96], sizes = [8, 32], strides = [1, 1]} : vector<8x128xf32> to vector<8x32xf32>
    %151 = arith.mulf %148, %114 : vector<8x32xf32>
    %152 = arith.mulf %147, %149 : vector<8x32xf32>
    %153 = arith.addf %151, %152 : vector<8x32xf32>
    %154 = math.tanh %153 : vector<8x32xf32>
    %155 = arith.mulf %150, %154 : vector<8x32xf32>
    %156 = tpu.concatenate %138, %155 in 1 : vector<8x32xf32>, vector<8x32xf32> -> vector<8x64xf32>
    %157 = arith.truncf %156 : vector<8x64xf32> to vector<8x64xbf16>
    %cst_25 = arith.constant dense<0.000000e+00> : vector<8x256xf32>
    %158 = tpu.matmul %157, %9, %cst_25 {dimension_numbers = #tpu.dot_dimension_numbers<[1], [0], [0], [1], [0, 0, 1, 1], [], []>} : vector<8x64xbf16>, vector<64x256xbf16>, vector<8x256xf32> -> vector<8x256xf32>
    %159 = vector.extract_strided_slice %158 {offsets = [0, 0], sizes = [8, 128], strides = [1, 1]} : vector<8x256xf32> to vector<8x128xf32>
    %160 = vector.extract_strided_slice %8 {offsets = [4, 0, 0], sizes = [1, 8, 128], strides = [1, 1, 1]} : vector<8x8x128xf32> to vector<1x8x128xf32>
    %161 = vector.shape_cast %160 : vector<1x8x128xf32> to vector<8x128xf32>
    %162 = arith.addf %159, %161 : vector<8x128xf32>
    %163 = arith.negf %162 : vector<8x128xf32>
    %164 = math.exp %163 : vector<8x128xf32>
    %cst_26 = arith.constant 1.000000e+00 : f32
    %165 = vector.broadcast %cst_26 : f32 to vector<8x128xf32>
    %166 = arith.addf %165, %164 : vector<8x128xf32>
    %167 = arith.divf %165, %166 : vector<8x128xf32>
    %168 = math.tanh %162 : vector<8x128xf32>
    %169 = vector.extract_strided_slice %167 {offsets = [0, 0], sizes = [8, 32], strides = [1, 1]} : vector<8x128xf32> to vector<8x32xf32>
    %170 = vector.extract_strided_slice %167 {offsets = [0, 32], sizes = [8, 32], strides = [1, 1]} : vector<8x128xf32> to vector<8x32xf32>
    %171 = vector.extract_strided_slice %168 {offsets = [0, 64], sizes = [8, 32], strides = [1, 1]} : vector<8x128xf32> to vector<8x32xf32>
    %172 = vector.extract_strided_slice %167 {offsets = [0, 96], sizes = [8, 32], strides = [1, 1]} : vector<8x128xf32> to vector<8x32xf32>
    %173 = arith.mulf %170, %136 : vector<8x32xf32>
    %174 = arith.mulf %169, %171 : vector<8x32xf32>
    %175 = arith.addf %173, %174 : vector<8x32xf32>
    %176 = math.tanh %175 : vector<8x32xf32>
    %177 = arith.mulf %172, %176 : vector<8x32xf32>
    %178 = vector.extract_strided_slice %158 {offsets = [0, 128], sizes = [8, 128], strides = [1, 1]} : vector<8x256xf32> to vector<8x128xf32>
    %179 = arith.addf %178, %12 : vector<8x128xf32>
    %180 = arith.negf %179 : vector<8x128xf32>
    %181 = math.exp %180 : vector<8x128xf32>
    %cst_27 = arith.constant 1.000000e+00 : f32
    %182 = vector.broadcast %cst_27 : f32 to vector<8x128xf32>
    %183 = arith.addf %182, %181 : vector<8x128xf32>
    %184 = arith.divf %182, %183 : vector<8x128xf32>
    %185 = math.tanh %179 : vector<8x128xf32>
    %186 = vector.extract_strided_slice %184 {offsets = [0, 0], sizes = [8, 32], strides = [1, 1]} : vector<8x128xf32> to vector<8x32xf32>
    %187 = vector.extract_strided_slice %184 {offsets = [0, 32], sizes = [8, 32], strides = [1, 1]} : vector<8x128xf32> to vector<8x32xf32>
    %188 = vector.extract_strided_slice %185 {offsets = [0, 64], sizes = [8, 32], strides = [1, 1]} : vector<8x128xf32> to vector<8x32xf32>
    %189 = vector.extract_strided_slice %184 {offsets = [0, 96], sizes = [8, 32], strides = [1, 1]} : vector<8x128xf32> to vector<8x32xf32>
    %190 = arith.mulf %187, %153 : vector<8x32xf32>
    %191 = arith.mulf %186, %188 : vector<8x32xf32>
    %192 = arith.addf %190, %191 : vector<8x32xf32>
    %193 = math.tanh %192 : vector<8x32xf32>
    %194 = arith.mulf %189, %193 : vector<8x32xf32>
    %195 = tpu.concatenate %177, %194 in 1 : vector<8x32xf32>, vector<8x32xf32> -> vector<8x64xf32>
    %196 = arith.truncf %195 : vector<8x64xf32> to vector<8x64xbf16>
    %cst_28 = arith.constant dense<0.000000e+00> : vector<8x256xf32>
    %197 = tpu.matmul %196, %9, %cst_28 {dimension_numbers = #tpu.dot_dimension_numbers<[1], [0], [0], [1], [0, 0, 1, 1], [], []>} : vector<8x64xbf16>, vector<64x256xbf16>, vector<8x256xf32> -> vector<8x256xf32>
    %198 = vector.extract_strided_slice %197 {offsets = [0, 0], sizes = [8, 128], strides = [1, 1]} : vector<8x256xf32> to vector<8x128xf32>
    %199 = vector.extract_strided_slice %8 {offsets = [5, 0, 0], sizes = [1, 8, 128], strides = [1, 1, 1]} : vector<8x8x128xf32> to vector<1x8x128xf32>
    %200 = vector.shape_cast %199 : vector<1x8x128xf32> to vector<8x128xf32>
    %201 = arith.addf %198, %200 : vector<8x128xf32>
    %202 = arith.negf %201 : vector<8x128xf32>
    %203 = math.exp %202 : vector<8x128xf32>
    %cst_29 = arith.constant 1.000000e+00 : f32
    %204 = vector.broadcast %cst_29 : f32 to vector<8x128xf32>
    %205 = arith.addf %204, %203 : vector<8x128xf32>
    %206 = arith.divf %204, %205 : vector<8x128xf32>
    %207 = math.tanh %201 : vector<8x128xf32>
    %208 = vector.extract_strided_slice %206 {offsets = [0, 0], sizes = [8, 32], strides = [1, 1]} : vector<8x128xf32> to vector<8x32xf32>
    %209 = vector.extract_strided_slice %206 {offsets = [0, 32], sizes = [8, 32], strides = [1, 1]} : vector<8x128xf32> to vector<8x32xf32>
    %210 = vector.extract_strided_slice %207 {offsets = [0, 64], sizes = [8, 32], strides = [1, 1]} : vector<8x128xf32> to vector<8x32xf32>
    %211 = vector.extract_strided_slice %206 {offsets = [0, 96], sizes = [8, 32], strides = [1, 1]} : vector<8x128xf32> to vector<8x32xf32>
    %212 = arith.mulf %209, %175 : vector<8x32xf32>
    %213 = arith.mulf %208, %210 : vector<8x32xf32>
    %214 = arith.addf %212, %213 : vector<8x32xf32>
    %215 = math.tanh %214 : vector<8x32xf32>
    %216 = arith.mulf %211, %215 : vector<8x32xf32>
    %217 = vector.extract_strided_slice %197 {offsets = [0, 128], sizes = [8, 128], strides = [1, 1]} : vector<8x256xf32> to vector<8x128xf32>
    %218 = arith.addf %217, %12 : vector<8x128xf32>
    %219 = arith.negf %218 : vector<8x128xf32>
    %220 = math.exp %219 : vector<8x128xf32>
    %cst_30 = arith.constant 1.000000e+00 : f32
    %221 = vector.broadcast %cst_30 : f32 to vector<8x128xf32>
    %222 = arith.addf %221, %220 : vector<8x128xf32>
    %223 = arith.divf %221, %222 : vector<8x128xf32>
    %224 = math.tanh %218 : vector<8x128xf32>
    %225 = vector.extract_strided_slice %223 {offsets = [0, 0], sizes = [8, 32], strides = [1, 1]} : vector<8x128xf32> to vector<8x32xf32>
    %226 = vector.extract_strided_slice %223 {offsets = [0, 32], sizes = [8, 32], strides = [1, 1]} : vector<8x128xf32> to vector<8x32xf32>
    %227 = vector.extract_strided_slice %224 {offsets = [0, 64], sizes = [8, 32], strides = [1, 1]} : vector<8x128xf32> to vector<8x32xf32>
    %228 = vector.extract_strided_slice %223 {offsets = [0, 96], sizes = [8, 32], strides = [1, 1]} : vector<8x128xf32> to vector<8x32xf32>
    %229 = arith.mulf %226, %192 : vector<8x32xf32>
    %230 = arith.mulf %225, %227 : vector<8x32xf32>
    %231 = arith.addf %229, %230 : vector<8x32xf32>
    %232 = math.tanh %231 : vector<8x32xf32>
    %233 = arith.mulf %228, %232 : vector<8x32xf32>
    %234 = tpu.concatenate %216, %233 in 1 : vector<8x32xf32>, vector<8x32xf32> -> vector<8x64xf32>
    %235 = arith.truncf %234 : vector<8x64xf32> to vector<8x64xbf16>
    %cst_31 = arith.constant dense<0.000000e+00> : vector<8x256xf32>
    %236 = tpu.matmul %235, %9, %cst_31 {dimension_numbers = #tpu.dot_dimension_numbers<[1], [0], [0], [1], [0, 0, 1, 1], [], []>} : vector<8x64xbf16>, vector<64x256xbf16>, vector<8x256xf32> -> vector<8x256xf32>
    %237 = vector.extract_strided_slice %236 {offsets = [0, 0], sizes = [8, 128], strides = [1, 1]} : vector<8x256xf32> to vector<8x128xf32>
    %238 = vector.extract_strided_slice %8 {offsets = [6, 0, 0], sizes = [1, 8, 128], strides = [1, 1, 1]} : vector<8x8x128xf32> to vector<1x8x128xf32>
    %239 = vector.shape_cast %238 : vector<1x8x128xf32> to vector<8x128xf32>
    %240 = arith.addf %237, %239 : vector<8x128xf32>
    %241 = arith.negf %240 : vector<8x128xf32>
    %242 = math.exp %241 : vector<8x128xf32>
    %cst_32 = arith.constant 1.000000e+00 : f32
    %243 = vector.broadcast %cst_32 : f32 to vector<8x128xf32>
    %244 = arith.addf %243, %242 : vector<8x128xf32>
    %245 = arith.divf %243, %244 : vector<8x128xf32>
    %246 = math.tanh %240 : vector<8x128xf32>
    %247 = vector.extract_strided_slice %245 {offsets = [0, 0], sizes = [8, 32], strides = [1, 1]} : vector<8x128xf32> to vector<8x32xf32>
    %248 = vector.extract_strided_slice %245 {offsets = [0, 32], sizes = [8, 32], strides = [1, 1]} : vector<8x128xf32> to vector<8x32xf32>
    %249 = vector.extract_strided_slice %246 {offsets = [0, 64], sizes = [8, 32], strides = [1, 1]} : vector<8x128xf32> to vector<8x32xf32>
    %250 = vector.extract_strided_slice %245 {offsets = [0, 96], sizes = [8, 32], strides = [1, 1]} : vector<8x128xf32> to vector<8x32xf32>
    %251 = arith.mulf %248, %214 : vector<8x32xf32>
    %252 = arith.mulf %247, %249 : vector<8x32xf32>
    %253 = arith.addf %251, %252 : vector<8x32xf32>
    %254 = math.tanh %253 : vector<8x32xf32>
    %255 = arith.mulf %250, %254 : vector<8x32xf32>
    %256 = vector.extract_strided_slice %236 {offsets = [0, 128], sizes = [8, 128], strides = [1, 1]} : vector<8x256xf32> to vector<8x128xf32>
    %257 = arith.addf %256, %12 : vector<8x128xf32>
    %258 = arith.negf %257 : vector<8x128xf32>
    %259 = math.exp %258 : vector<8x128xf32>
    %cst_33 = arith.constant 1.000000e+00 : f32
    %260 = vector.broadcast %cst_33 : f32 to vector<8x128xf32>
    %261 = arith.addf %260, %259 : vector<8x128xf32>
    %262 = arith.divf %260, %261 : vector<8x128xf32>
    %263 = math.tanh %257 : vector<8x128xf32>
    %264 = vector.extract_strided_slice %262 {offsets = [0, 0], sizes = [8, 32], strides = [1, 1]} : vector<8x128xf32> to vector<8x32xf32>
    %265 = vector.extract_strided_slice %262 {offsets = [0, 32], sizes = [8, 32], strides = [1, 1]} : vector<8x128xf32> to vector<8x32xf32>
    %266 = vector.extract_strided_slice %263 {offsets = [0, 64], sizes = [8, 32], strides = [1, 1]} : vector<8x128xf32> to vector<8x32xf32>
    %267 = vector.extract_strided_slice %262 {offsets = [0, 96], sizes = [8, 32], strides = [1, 1]} : vector<8x128xf32> to vector<8x32xf32>
    %268 = arith.mulf %265, %231 : vector<8x32xf32>
    %269 = arith.mulf %264, %266 : vector<8x32xf32>
    %270 = arith.addf %268, %269 : vector<8x32xf32>
    %271 = math.tanh %270 : vector<8x32xf32>
    %272 = arith.mulf %267, %271 : vector<8x32xf32>
    %273 = tpu.concatenate %255, %272 in 1 : vector<8x32xf32>, vector<8x32xf32> -> vector<8x64xf32>
    %274 = arith.truncf %273 : vector<8x64xf32> to vector<8x64xbf16>
    %cst_34 = arith.constant dense<0.000000e+00> : vector<8x256xf32>
    %275 = tpu.matmul %274, %9, %cst_34 {dimension_numbers = #tpu.dot_dimension_numbers<[1], [0], [0], [1], [0, 0, 1, 1], [], []>} : vector<8x64xbf16>, vector<64x256xbf16>, vector<8x256xf32> -> vector<8x256xf32>
    %276 = vector.extract_strided_slice %275 {offsets = [0, 0], sizes = [8, 128], strides = [1, 1]} : vector<8x256xf32> to vector<8x128xf32>
    %277 = vector.extract_strided_slice %8 {offsets = [7, 0, 0], sizes = [1, 8, 128], strides = [1, 1, 1]} : vector<8x8x128xf32> to vector<1x8x128xf32>
    %278 = vector.shape_cast %277 : vector<1x8x128xf32> to vector<8x128xf32>
    %279 = arith.addf %276, %278 : vector<8x128xf32>
    %280 = arith.negf %279 : vector<8x128xf32>
    %281 = math.exp %280 : vector<8x128xf32>
    %cst_35 = arith.constant 1.000000e+00 : f32
    %282 = vector.broadcast %cst_35 : f32 to vector<8x128xf32>
    %283 = arith.addf %282, %281 : vector<8x128xf32>
    %284 = arith.divf %282, %283 : vector<8x128xf32>
    %285 = math.tanh %279 : vector<8x128xf32>
    %286 = vector.extract_strided_slice %284 {offsets = [0, 0], sizes = [8, 32], strides = [1, 1]} : vector<8x128xf32> to vector<8x32xf32>
    %287 = vector.extract_strided_slice %284 {offsets = [0, 32], sizes = [8, 32], strides = [1, 1]} : vector<8x128xf32> to vector<8x32xf32>
    %288 = vector.extract_strided_slice %285 {offsets = [0, 64], sizes = [8, 32], strides = [1, 1]} : vector<8x128xf32> to vector<8x32xf32>
    %289 = vector.extract_strided_slice %284 {offsets = [0, 96], sizes = [8, 32], strides = [1, 1]} : vector<8x128xf32> to vector<8x32xf32>
    %290 = arith.mulf %287, %253 : vector<8x32xf32>
    %291 = arith.mulf %286, %288 : vector<8x32xf32>
    %292 = arith.addf %290, %291 : vector<8x32xf32>
    %293 = math.tanh %292 : vector<8x32xf32>
    %294 = arith.mulf %289, %293 : vector<8x32xf32>
    %295 = vector.extract_strided_slice %275 {offsets = [0, 128], sizes = [8, 128], strides = [1, 1]} : vector<8x256xf32> to vector<8x128xf32>
    %296 = arith.addf %295, %12 : vector<8x128xf32>
    %297 = arith.negf %296 : vector<8x128xf32>
    %298 = math.exp %297 : vector<8x128xf32>
    %cst_36 = arith.constant 1.000000e+00 : f32
    %299 = vector.broadcast %cst_36 : f32 to vector<8x128xf32>
    %300 = arith.addf %299, %298 : vector<8x128xf32>
    %301 = arith.divf %299, %300 : vector<8x128xf32>
    %302 = math.tanh %296 : vector<8x128xf32>
    %303 = vector.extract_strided_slice %301 {offsets = [0, 0], sizes = [8, 32], strides = [1, 1]} : vector<8x128xf32> to vector<8x32xf32>
    %304 = vector.extract_strided_slice %301 {offsets = [0, 32], sizes = [8, 32], strides = [1, 1]} : vector<8x128xf32> to vector<8x32xf32>
    %305 = vector.extract_strided_slice %302 {offsets = [0, 64], sizes = [8, 32], strides = [1, 1]} : vector<8x128xf32> to vector<8x32xf32>
    %306 = vector.extract_strided_slice %301 {offsets = [0, 96], sizes = [8, 32], strides = [1, 1]} : vector<8x128xf32> to vector<8x32xf32>
    %307 = arith.mulf %304, %270 : vector<8x32xf32>
    %308 = arith.mulf %303, %305 : vector<8x32xf32>
    %309 = arith.addf %307, %308 : vector<8x32xf32>
    %310 = math.tanh %309 : vector<8x32xf32>
    %311 = arith.mulf %306, %310 : vector<8x32xf32>
    %312 = tpu.concatenate %294, %311 in 1 : vector<8x32xf32>, vector<8x32xf32> -> vector<8x64xf32>
    %313 = arith.truncf %312 : vector<8x64xf32> to vector<8x64xbf16>
    %cst_37 = arith.constant dense<0.000000e+00> : vector<8x256xf32>
    %314 = tpu.matmul %313, %9, %cst_37 {dimension_numbers = #tpu.dot_dimension_numbers<[1], [0], [0], [1], [0, 0, 1, 1], [], []>} : vector<8x64xbf16>, vector<64x256xbf16>, vector<8x256xf32> -> vector<8x256xf32>
    %315 = vector.extract_strided_slice %314 {offsets = [0, 128], sizes = [8, 128], strides = [1, 1]} : vector<8x256xf32> to vector<8x128xf32>
    %316 = arith.addf %315, %12 : vector<8x128xf32>
    %317 = arith.negf %316 : vector<8x128xf32>
    %318 = math.exp %317 : vector<8x128xf32>
    %cst_38 = arith.constant 1.000000e+00 : f32
    %319 = vector.broadcast %cst_38 : f32 to vector<8x128xf32>
    %320 = arith.addf %319, %318 : vector<8x128xf32>
    %321 = arith.divf %319, %320 : vector<8x128xf32>
    %322 = math.tanh %316 : vector<8x128xf32>
    %323 = vector.extract_strided_slice %321 {offsets = [0, 0], sizes = [8, 32], strides = [1, 1]} : vector<8x128xf32> to vector<8x32xf32>
    %324 = vector.extract_strided_slice %321 {offsets = [0, 32], sizes = [8, 32], strides = [1, 1]} : vector<8x128xf32> to vector<8x32xf32>
    %325 = vector.extract_strided_slice %322 {offsets = [0, 64], sizes = [8, 32], strides = [1, 1]} : vector<8x128xf32> to vector<8x32xf32>
    %326 = vector.extract_strided_slice %321 {offsets = [0, 96], sizes = [8, 32], strides = [1, 1]} : vector<8x128xf32> to vector<8x32xf32>
    %327 = arith.mulf %324, %309 : vector<8x32xf32>
    %328 = arith.mulf %323, %325 : vector<8x32xf32>
    %329 = arith.addf %327, %328 : vector<8x32xf32>
    %330 = math.tanh %329 : vector<8x32xf32>
    %331 = arith.mulf %326, %330 : vector<8x32xf32>
    %332 = arith.truncf %331 : vector<8x32xf32> to vector<8x32xbf16>
    %c0_39 = arith.constant 0 : index
    %c0_40 = arith.constant 0 : index
    %333 = vector.load %arg5[%c0_39, %c0_40] : memref<32x8xbf16, #tpu.memory_space<vmem>>, vector<32x8xbf16>
    %cst_41 = arith.constant dense<0.000000e+00> : vector<8x8xf32>
    %334 = tpu.matmul %332, %333, %cst_41 {dimension_numbers = #tpu.dot_dimension_numbers<[1], [0], [0], [1], [0, 0, 1, 1], [], []>} : vector<8x32xbf16>, vector<32x8xbf16>, vector<8x8xf32> -> vector<8x8xf32>
    %c0_42 = arith.constant 0 : index
    %c0_43 = arith.constant 0 : index
    %335 = vector.load %arg6[%c0_42, %c0_43] : memref<1x8xf32, #tpu.memory_space<vmem>>, vector<1x8xf32>
    %336 = vector.broadcast %335 : vector<1x8xf32> to vector<8x8xf32>
    %337 = arith.addf %334, %336 : vector<8x8xf32>
    %c0_44 = arith.constant 0 : index
    %c0_45 = arith.constant 0 : index
    %338 = vector.load %arg7[%c0_44, %c0_45] : memref<8x8xf32, #tpu.memory_space<vmem>>, vector<8x8xf32>
    tpu.vector_store %arg7[%c0_44, %c0_45], %337 {strides = array<i32>} : memref<8x8xf32, #tpu.memory_space<vmem>>, vector<8x8xf32>,
    return
  }
}

</mosaic_0001>

<llo_original>
// kernel: simple_lstm_forward.1
$region0: #{simple_lstm_forward.1}
  #allocation0 [shape = 'u32[]', space=smem, size = 0x4, offset = 0x4, fixed_abs, tag = 'smem constant byte address 0x4 - core index']
  #allocation1 [shape = 'u32[144,128]{1,0:T(1,128)}', space=vmem, size = 0x12000, scoped, tag = 'internal scratch']
  %s0 = inlined_call_operand.vmem [shape: f32[8,8,16], index: 0, kind: input, shape index: {}]
  %s1 = inlined_call_operand.vmem [shape: bf16[16,128], index: 1, kind: input, shape index: {}]
  %s2 = inlined_call_operand.vmem [shape: f32[1,128], index: 2, kind: input, shape index: {}]
  %s3 = inlined_call_operand.vmem [shape: bf16[64,256], index: 3, kind: input, shape index: {}]
  %s4 = inlined_call_operand.vmem [shape: f32[1,128], index: 4, kind: input, shape index: {}]
  %s5 = inlined_call_operand.vmem [shape: bf16[32,8], index: 5, kind: input, shape index: {}]
  %s6 = inlined_call_operand.vmem [shape: f32[1,8], index: 6, kind: input, shape index: {}]
  %s7 = inlined_call_operand.vmem [shape: f32[8,8], index: 7, kind: output, shape index: {}]
  %s8 = sld [smem:[#allocation0]]
  $region38: #{simple_lstm_forward.1} parent=0
    _
  %s10 = ssub.s32 1, %s8
  %s11 = scalar_select 0, %s10, %s8
  // Predicated region
  $region2: #{simple_lstm_forward.1} parent=0 // pred_check
    _
  $region3: #{simple_lstm_forward.1} parent=0 // pred_check_branch
    %13 = sbr.rel (0) target = $region5
  $region4: #{simple_lstm_forward.1} parent=0 // pred_region
    _
  $region5: #{simple_lstm_forward.1} parent=0 // pred_fallthru
    _
  // Predicated region
  $region6: #{simple_lstm_forward.1} parent=0 // pred_check
    _
  $region7: #{simple_lstm_forward.1} parent=0 // pred_check_branch
    %15 = sbr.rel (0) target = $region9
  $region8: #{simple_lstm_forward.1} parent=0 // pred_region
    _
  $region9: #{simple_lstm_forward.1} parent=0 // pred_fallthru
    _
  // Predicated region
  $region10: #{simple_lstm_forward.1} parent=0 // pred_check
    _
  $region11: #{simple_lstm_forward.1} parent=0 // pred_check_branch
    %17 = sbr.rel (0) target = $region13
  $region12: #{simple_lstm_forward.1} parent=0 // pred_region
    _
  $region13: #{simple_lstm_forward.1} parent=0 // pred_fallthru
    _
  // Predicated region
  $region14: #{simple_lstm_forward.1} parent=0 // pred_check
    _
  $region15: #{simple_lstm_forward.1} parent=0 // pred_check_branch
    %19 = sbr.rel (0) target = $region17
  $region16: #{simple_lstm_forward.1} parent=0 // pred_region
    _
  $region17: #{simple_lstm_forward.1} parent=0 // pred_fallthru
    _
  // Predicated region
  $region18: #{simple_lstm_forward.1} parent=0 // pred_check
    _
  $region19: #{simple_lstm_forward.1} parent=0 // pred_check_branch
    %21 = sbr.rel (0) target = $region21
  $region20: #{simple_lstm_forward.1} parent=0 // pred_region
    _
  $region21: #{simple_lstm_forward.1} parent=0 // pred_fallthru
    _
  // Predicated region
  $region22: #{simple_lstm_forward.1} parent=0 // pred_check
    _
  $region23: #{simple_lstm_forward.1} parent=0 // pred_check_branch
    %23 = sbr.rel (0) target = $region25
  $region24: #{simple_lstm_forward.1} parent=0 // pred_region
    _
  $region25: #{simple_lstm_forward.1} parent=0 // pred_fallthru
    _
  // Predicated region
  $region26: #{simple_lstm_forward.1} parent=0 // pred_check
    _
  $region27: #{simple_lstm_forward.1} parent=0 // pred_check_branch
    %25 = sbr.rel (0) target = $region29
  $region28: #{simple_lstm_forward.1} parent=0 // pred_region
    _
  $region29: #{simple_lstm_forward.1} parent=0 // pred_fallthru
    _
  %v27 = vld [vmem:[%s0] sm:$0xff]
  %v28 = vld [vmem:[%s0 + $0x8] sm:$0xff]
  %v29 = vld [vmem:[%s0 + $0x10] sm:$0xff]
  %v30 = vld [vmem:[%s0 + $0x18] sm:$0xff]
  %v31 = vld [vmem:[%s0 + $0x20] sm:$0xff]
  %v32 = vld [vmem:[%s0 + $0x28] sm:$0xff]
  %v33 = vld [vmem:[%s0 + $0x30] sm:$0xff]
  %v34 = vld [vmem:[%s0 + $0x38] sm:$0xff]
  %v35 = vpack.c.bf16 %v28, %v27
  %v36 = vpack.c.bf16 %v30, %v29
  %v37 = vpack.c.bf16 %v32, %v31
  %v38 = vpack.c.bf16 %v34, %v33
  %v39 = vld [vmem:[%s1] sm:$0xf]
  %v40 = vld [vmem:[%s1 + $0x4] sm:$0xf]
  %v41 = vld [vmem:[%s2] sm:$0x1]
  %v43 = vlaneseq
  %v44 = vshrl.u32 %v43, 7
  %v45 = vsub.s32 0, %v44
  %v46 = vrot.slane %v41, %v45
  %v50 = vunpack.c.l.b16 %v39
  %v51 = vunpack.c.l.b16 %v40
  %v52 = vpack.c.b16 %v51, %v50
  %vm54 = vcmask 130048
  %v56 = vsel %vm54, %v35, 0
  %v59 = vsel %vm54, %v36, 0
  %v62 = vsel %vm54, %v37, 0
  %v65 = vsel %vm54, %v38, 0
  %67 = vmatprep.subr.bf16.mxu0 0
  %68 = vmatpush1.bf16.msra.mxu0 %v52
  %69 = vmatprep.subr.bf16.mxu0 0
  %70 = vmatpush1.bf16.msra.mxu0 0
  %71 = vmatprep.subr.bf16.mxu0 0
  %72 = vmatpush1.bf16.msra.mxu0 0
  %73 = vmatprep.subr.bf16.mxu0 0
  %74 = vmatpush1.bf16.msra.mxu0 0
  %75 = vmatprep.subr.bf16.mxu0 0
  %76 = vmatpush1.bf16.msra.mxu0 0
  %77 = vmatprep.subr.bf16.mxu0 0
  %78 = vmatpush1.bf16.msra.mxu0 0
  %79 = vmatprep.subr.bf16.mxu0 0
  %80 = vmatpush1.bf16.msra.mxu0 0
  %81 = vmatprep.subr.bf16.mxu0 0
  %82 = vmatpush1.bf16.msra.mxu0 0
  %83 = vmatprep.subr.bf16.mxu0 0
  %84 = vmatpush1.bf16.msra.mxu0 0
  %85 = vmatprep.subr.bf16.mxu0 0
  %86 = vmatpush1.bf16.msra.mxu0 0
  %87 = vmatprep.subr.bf16.mxu0 0
  %88 = vmatpush1.bf16.msra.mxu0 0
  %89 = vmatprep.subr.bf16.mxu0 0
  %90 = vmatpush1.bf16.msra.mxu0 0
  %91 = vmatprep.subr.bf16.mxu0 0
  %92 = vmatpush1.bf16.msra.mxu0 0
  %93 = vmatprep.subr.bf16.mxu0 0
  %94 = vmatpush1.bf16.msra.mxu0 0
  %95 = vmatprep.subr.bf16.mxu0 0
  %96 = vmatpush1.bf16.msra.mxu0 0
  %97 = vmatprep.subr.bf16.mxu0 0
  %98 = vmatpush1.bf16.msra.mxu0 0
  %99 = vmatprep.mubr.bf16.mxu0 0
  %100 = vmatmul.mubr.bf16.gmra.mrb[0].mxu0 %v56
  %v101 = vpop.f32.mrb[0].mxu0
  %v102 = vadd.f32 %v46, %v101
  %v103 = vpop.f32.mrb[0].mxu0
  %v104 = vpop.f32.mrb[0].mxu0
  %v105 = vadd.f32 %v46, %v104
  %v106 = vpop.f32.mrb[0].mxu0
  %107 = vmatprep.mubr.bf16.mxu0 0
  %108 = vmatmul.mubr.bf16.gmra.mrb[0].mxu0 %v59
  %v109 = vpop.f32.mrb[0].mxu0
  %v110 = vadd.f32 %v46, %v109
  %v111 = vpop.f32.mrb[0].mxu0
  %v112 = vpop.f32.mrb[0].mxu0
  %v113 = vadd.f32 %v46, %v112
  %v114 = vpop.f32.mrb[0].mxu0
  %115 = vmatprep.mubr.bf16.mxu0 0
  %116 = vmatmul.mubr.bf16.gmra.mrb[0].mxu0 %v62
  %v117 = vpop.f32.mrb[0].mxu0
  %v118 = vadd.f32 %v46, %v117
  %v119 = vpop.f32.mrb[0].mxu0
  %v120 = vpop.f32.mrb[0].mxu0
  %v121 = vadd.f32 %v46, %v120
  %v122 = vpop.f32.mrb[0].mxu0
  %123 = vmatprep.mubr.bf16.mxu0 0
  %124 = vmatmul.mubr.bf16.gmra.mrb[0].mxu0 %v65
  %v125 = vpop.f32.mrb[0].mxu0
  %v126 = vadd.f32 %v46, %v125
  %v127 = vpop.f32.mrb[0].mxu0
  %v128 = vpop.f32.mrb[0].mxu0
  %v129 = vadd.f32 %v46, %v128
  %v130 = vpop.f32.mrb[0].mxu0
  %131 = vdwg.mxu0
  %v132 = vld [vmem:[%s3] sm:$0xff]
  %v133 = vld [vmem:[%s3 + $0x8] sm:$0xff]
  %v134 = vld [vmem:[%s3 + $0x10] sm:$0xff]
  %v135 = vld [vmem:[%s3 + $0x18] sm:$0xff]
  %v136 = vld [vmem:[%s3 + $0x20] sm:$0xff]
  %v137 = vld [vmem:[%s3 + $0x28] sm:$0xff]
  %v138 = vld [vmem:[%s3 + $0x30] sm:$0xff]
  %v139 = vld [vmem:[%s3 + $0x38] sm:$0xff]
  %v140 = vld [vmem:[%s4] sm:$0x1]
  %v142 = vlaneseq
  %v143 = vshrl.u32 %v142, 7
  %v144 = vsub.s32 0, %v143
  %v145 = vrot.slane %v140, %v144
  %v147 = vpack.c.bf16 0.0, 0.0
  %v156 = vunpack.c.l.b16 %v132
  %v157 = vunpack.c.h.b16 %v132
  %v158 = vunpack.c.l.b16 %v133
  %v159 = vunpack.c.h.b16 %v133
  %v160 = vunpack.c.l.b16 %v134
  %v161 = vunpack.c.h.b16 %v134
  %v162 = vunpack.c.l.b16 %v135
  %v163 = vunpack.c.h.b16 %v135
  %v164 = vunpack.c.l.b16 %v136
  %v165 = vunpack.c.h.b16 %v136
  %v166 = vunpack.c.l.b16 %v137
  %v167 = vunpack.c.h.b16 %v137
  %v168 = vunpack.c.l.b16 %v138
  %v169 = vunpack.c.h.b16 %v138
  %v170 = vunpack.c.l.b16 %v139
  %v171 = vunpack.c.h.b16 %v139
  %v172 = vpack.c.b16 %v158, %v156
  %v173 = vpack.c.b16 %v159, %v157
  %v174 = vpack.c.b16 %v162, %v160
  %v175 = vpack.c.b16 %v163, %v161
  %v176 = vpack.c.b16 %v166, %v164
  %v177 = vpack.c.b16 %v167, %v165
  %v178 = vpack.c.b16 %v170, %v168
  %v179 = vpack.c.b16 %v171, %v169
  %vm188 = vcmask 523264
  %v190 = vsel %vm188, %v147, 0
  %192 = vmatprep.subr.bf16.mxu0 %v173
  %193 = vmatpush1.bf16.msra.mxu0 %v172
  %194 = vmatprep.subr.bf16.mxu0 %v175
  %195 = vmatpush1.bf16.msra.mxu0 %v174
  %196 = vmatprep.subr.bf16.mxu0 %v177
  %197 = vmatpush1.bf16.msra.mxu0 %v176
  %198 = vmatprep.subr.bf16.mxu0 %v179
  %199 = vmatpush1.bf16.msra.mxu0 %v178
  %200 = vmatprep.subr.bf16.mxu0 0
  %201 = vmatpush1.bf16.msra.mxu0 0
  %202 = vmatprep.subr.bf16.mxu0 0
  %203 = vmatpush1.bf16.msra.mxu0 0
  %204 = vmatprep.subr.bf16.mxu0 0
  %205 = vmatpush1.bf16.msra.mxu0 0
  %206 = vmatprep.subr.bf16.mxu0 0
  %207 = vmatpush1.bf16.msra.mxu0 0
  %208 = vmatprep.subr.bf16.mxu0 0
  %209 = vmatpush1.bf16.msra.mxu0 0
  %210 = vmatprep.subr.bf16.mxu0 0
  %211 = vmatpush1.bf16.msra.mxu0 0
  %212 = vmatprep.subr.bf16.mxu0 0
  %213 = vmatpush1.bf16.msra.mxu0 0
  %214 = vmatprep.subr.bf16.mxu0 0
  %215 = vmatpush1.bf16.msra.mxu0 0
  %216 = vmatprep.subr.bf16.mxu0 0
  %217 = vmatpush1.bf16.msra.mxu0 0
  %218 = vmatprep.subr.bf16.mxu0 0
  %219 = vmatpush1.bf16.msra.mxu0 0
  %220 = vmatprep.subr.bf16.mxu0 0
  %221 = vmatpush1.bf16.msra.mxu0 0
  %222 = vmatprep.subr.bf16.mxu0 0
  %223 = vmatpush1.bf16.msra.mxu0 0
  %224 = vmatprep.mubr.bf16.mxu0 0
  %225 = vmatmul.mubr.bf16.gmra.mrb[0].mxu0 %v190
  %v226 = vpop.f32.mrb[0].mxu0
  %v227 = vadd.f32 0.0, %v226
  %v228 = vpop.f32.mrb[0].mxu0
  %v229 = vpop.f32.mrb[0].mxu0
  %v230 = vpop.f32.mrb[0].mxu0
  %231 = vdwg.mxu0
  %v232 = vadd.f32 %v227, %v102
  %v233 = vxor.u32 %v232, 2147483648
  %v234 = vmul.f32 %v233, 1.442695
  %v235 = vpow.pop %v234
  %v236 = vadd.f32 %v235, 1.0
  %v237 = vrcp.pop %v236
  %v238 = vmul.f32 1.0, %v237
  %v239 = vtanh.pop %v232
  %v240 = vmul.f32 %v238, 0.0
  %242 = vrot.lane.b32.xlu0 %v239, 64
  %v243 = vpop.permute.xlu0 %242
  %v245 = vmul.f32 %v238, %v243
  %247 = vrot.lane.b32.xlu0 %v245, 32
  %v248 = vpop.permute.xlu0 %247
  %v250 = vadd.f32 %v240, %v248
  %v251 = vtanh.pop %v250
  %253 = vrot.lane.b32.xlu0 %v251, 64
  %v254 = vpop.permute.xlu0 %253
  %v256 = vmul.f32 %v238, %v254
  %258 = vrot.lane.b32.xlu0 %v256, 32
  %v259 = vpop.permute.xlu0 %258
  %vm261 = vcmask 261120
  %v262 = vsel %vm261, %v259, 0.0
  %v263 = vpack.c.bf16 %v262, %v262
  %v265 = vsel %vm188, %v263, 0
  %267 = vmatprep.subr.bf16.mxu0 %v173
  %268 = vmatpush1.bf16.msra.mxu0 %v172
  %269 = vmatprep.subr.bf16.mxu0 %v175
  %270 = vmatpush1.bf16.msra.mxu0 %v174
  %271 = vmatprep.subr.bf16.mxu0 %v177
  %272 = vmatpush1.bf16.msra.mxu0 %v176
  %273 = vmatprep.subr.bf16.mxu0 %v179
  %274 = vmatpush1.bf16.msra.mxu0 %v178
  %275 = vmatprep.subr.bf16.mxu0 0
  %276 = vmatpush1.bf16.msra.mxu0 0
  %277 = vmatprep.subr.bf16.mxu0 0
  %278 = vmatpush1.bf16.msra.mxu0 0
  %279 = vmatprep.subr.bf16.mxu0 0
  %280 = vmatpush1.bf16.msra.mxu0 0
  %281 = vmatprep.subr.bf16.mxu0 0
  %282 = vmatpush1.bf16.msra.mxu0 0
  %283 = vmatprep.subr.bf16.mxu0 0
  %284 = vmatpush1.bf16.msra.mxu0 0
  %285 = vmatprep.subr.bf16.mxu0 0
  %286 = vmatpush1.bf16.msra.mxu0 0
  %287 = vmatprep.subr.bf16.mxu0 0
  %288 = vmatpush1.bf16.msra.mxu0 0
  %289 = vmatprep.subr.bf16.mxu0 0
  %290 = vmatpush1.bf16.msra.mxu0 0
  %291 = vmatprep.subr.bf16.mxu0 0
  %292 = vmatpush1.bf16.msra.mxu0 0
  %293 = vmatprep.subr.bf16.mxu0 0
  %294 = vmatpush1.bf16.msra.mxu0 0
  %295 = vmatprep.subr.bf16.mxu0 0
  %296 = vmatpush1.bf16.msra.mxu0 0
  %297 = vmatprep.subr.bf16.mxu0 0
  %298 = vmatpush1.bf16.msra.mxu0 0
  %299 = vmatprep.mubr.bf16.mxu0 0
  %300 = vmatmul.mubr.bf16.gmra.mrb[0].mxu0 %v265
  %v301 = vpop.f32.mrb[0].mxu0
  %v302 = vadd.f32 0.0, %v301
  %v303 = vpop.f32.mrb[0].mxu0
  %v304 = vadd.f32 0.0, %v303
  %v305 = vpop.f32.mrb[0].mxu0
  %v306 = vpop.f32.mrb[0].mxu0
  %307 = vdwg.mxu0
  %v308 = vadd.f32 %v302, %v105
  %v309 = vxor.u32 %v308, 2147483648
  %v310 = vmul.f32 %v309, 1.442695
  %v311 = vpow.pop %v310
  %v312 = vadd.f32 %v311, 1.0
  %v313 = vrcp.pop %v312
  %v314 = vmul.f32 1.0, %v313
  %v315 = vtanh.pop %v308
  %v316 = vmul.f32 %v314, %v250
  %318 = vrot.lane.b32.xlu0 %v315, 64
  %v319 = vpop.permute.xlu0 %318
  %v321 = vmul.f32 %v314, %v319
  %323 = vrot.lane.b32.xlu0 %v321, 32
  %v324 = vpop.permute.xlu0 %323
  %v326 = vadd.f32 %v316, %v324
  %v327 = vtanh.pop %v326
  %329 = vrot.lane.b32.xlu0 %v327, 64
  %v330 = vpop.permute.xlu0 %329
  %v332 = vmul.f32 %v314, %v330
  %v333 = vadd.f32 %v304, %v145
  %v334 = vxor.u32 %v333, 2147483648
  %v335 = vmul.f32 %v334, 1.442695
  %v336 = vpow.pop %v335
  %v337 = vadd.f32 %v336, 1.0
  %v338 = vrcp.pop %v337
  %v339 = vmul.f32 1.0, %v338
  %v340 = vtanh.pop %v333
  %v341 = vmul.f32 %v339, 0.0
  %343 = vrot.lane.b32.xlu0 %v340, 64
  %v344 = vpop.permute.xlu0 %343
  %v346 = vmul.f32 %v339, %v344
  %348 = vrot.lane.b32.xlu0 %v346, 32
  %v349 = vpop.permute.xlu0 %348
  %v351 = vadd.f32 %v341, %v349
  %v352 = vtanh.pop %v351
  %354 = vrot.lane.b32.xlu0 %v352, 64
  %v355 = vpop.permute.xlu0 %354
  %v357 = vmul.f32 %v339, %v355
  %359 = vrot.lane.b32.xlu0 %v332, 32
  %v360 = vpop.permute.xlu0 %359
  %363 = vrot.lane.b32.xlu0 %v357, 64
  %v364 = vpop.permute.xlu0 %363
  %v366 = vsel %vm261, %v360, %v364
  %v367 = vpack.c.bf16 %v366, %v366
  %v369 = vsel %vm188, %v367, 0
  %371 = vmatprep.subr.bf16.mxu0 %v173
  %372 = vmatpush1.bf16.msra.mxu0 %v172
  %373 = vmatprep.subr.bf16.mxu0 %v175
  %374 = vmatpush1.bf16.msra.mxu0 %v174
  %375 = vmatprep.subr.bf16.mxu0 %v177
  %376 = vmatpush1.bf16.msra.mxu0 %v176
  %377 = vmatprep.subr.bf16.mxu0 %v179
  %378 = vmatpush1.bf16.msra.mxu0 %v178
  %379 = vmatprep.subr.bf16.mxu0 0
  %380 = vmatpush1.bf16.msra.mxu0 0
  %381 = vmatprep.subr.bf16.mxu0 0
  %382 = vmatpush1.bf16.msra.mxu0 0
  %383 = vmatprep.subr.bf16.mxu0 0
  %384 = vmatpush1.bf16.msra.mxu0 0
  %385 = vmatprep.subr.bf16.mxu0 0
  %386 = vmatpush1.bf16.msra.mxu0 0
  %387 = vmatprep.subr.bf16.mxu0 0
  %388 = vmatpush1.bf16.msra.mxu0 0
  %389 = vmatprep.subr.bf16.mxu0 0
  %390 = vmatpush1.bf16.msra.mxu0 0
  %391 = vmatprep.subr.bf16.mxu0 0
  %392 = vmatpush1.bf16.msra.mxu0 0
  %393 = vmatprep.subr.bf16.mxu0 0
  %394 = vmatpush1.bf16.msra.mxu0 0
  %395 = vmatprep.subr.bf16.mxu0 0
  %396 = vmatpush1.bf16.msra.mxu0 0
  %397 = vmatprep.subr.bf16.mxu0 0
  %398 = vmatpush1.bf16.msra.mxu0 0
  %399 = vmatprep.subr.bf16.mxu0 0
  %400 = vmatpush1.bf16.msra.mxu0 0
  %401 = vmatprep.subr.bf16.mxu0 0
  %402 = vmatpush1.bf16.msra.mxu0 0
  %403 = vmatprep.mubr.bf16.mxu0 0
  %404 = vmatmul.mubr.bf16.gmra.mrb[0].mxu0 %v369
  %v405 = vpop.f32.mrb[0].mxu0
  %v406 = vadd.f32 0.0, %v405
  %v407 = vpop.f32.mrb[0].mxu0
  %v408 = vadd.f32 0.0, %v407
  %v409 = vpop.f32.mrb[0].mxu0
  %v410 = vpop.f32.mrb[0].mxu0
  %411 = vdwg.mxu0
  %v412 = vadd.f32 %v406, %v110
  %v413 = vxor.u32 %v412, 2147483648
  %v414 = vmul.f32 %v413, 1.442695
  %v415 = vpow.pop %v414
  %v416 = vadd.f32 %v415, 1.0
  %v417 = vrcp.pop %v416
  %v418 = vmul.f32 1.0, %v417
  %v419 = vtanh.pop %v412
  %v420 = vmul.f32 %v418, %v326
  %422 = vrot.lane.b32.xlu0 %v419, 64
  %v423 = vpop.permute.xlu0 %422
  %v425 = vmul.f32 %v418, %v423
  %427 = vrot.lane.b32.xlu0 %v425, 32
  %v428 = vpop.permute.xlu0 %427
  %v430 = vadd.f32 %v420, %v428
  %v431 = vtanh.pop %v430
  %433 = vrot.lane.b32.xlu0 %v431, 64
  %v434 = vpop.permute.xlu0 %433
  %v436 = vmul.f32 %v418, %v434
  %v437 = vadd.f32 %v408, %v145
  %v438 = vxor.u32 %v437, 2147483648
  %v439 = vmul.f32 %v438, 1.442695
  %v440 = vpow.pop %v439
  %v441 = vadd.f32 %v440, 1.0
  %v442 = vrcp.pop %v441
  %v443 = vmul.f32 1.0, %v442
  %v444 = vtanh.pop %v437
  %v445 = vmul.f32 %v443, %v351
  %447 = vrot.lane.b32.xlu0 %v444, 64
  %v448 = vpop.permute.xlu0 %447
  %v450 = vmul.f32 %v443, %v448
  %452 = vrot.lane.b32.xlu0 %v450, 32
  %v453 = vpop.permute.xlu0 %452
  %v455 = vadd.f32 %v445, %v453
  %v456 = vtanh.pop %v455
  %458 = vrot.lane.b32.xlu0 %v456, 64
  %v459 = vpop.permute.xlu0 %458
  %v461 = vmul.f32 %v443, %v459
  %463 = vrot.lane.b32.xlu0 %v436, 32
  %v464 = vpop.permute.xlu0 %463
  %467 = vrot.lane.b32.xlu0 %v461, 64
  %v468 = vpop.permute.xlu0 %467
  %v470 = vsel %vm261, %v464, %v468
  %v471 = vpack.c.bf16 %v470, %v470
  %v473 = vsel %vm188, %v471, 0
  %475 = vmatprep.subr.bf16.mxu0 %v173
  %476 = vmatpush1.bf16.msra.mxu0 %v172
  %477 = vmatprep.subr.bf16.mxu0 %v175
  %478 = vmatpush1.bf16.msra.mxu0 %v174
  %479 = vmatprep.subr.bf16.mxu0 %v177
  %480 = vmatpush1.bf16.msra.mxu0 %v176
  %481 = vmatprep.subr.bf16.mxu0 %v179
  %482 = vmatpush1.bf16.msra.mxu0 %v178
  %483 = vmatprep.subr.bf16.mxu0 0
  %484 = vmatpush1.bf16.msra.mxu0 0
  %485 = vmatprep.subr.bf16.mxu0 0
  %486 = vmatpush1.bf16.msra.mxu0 0
  %487 = vmatprep.subr.bf16.mxu0 0
  %488 = vmatpush1.bf16.msra.mxu0 0
  %489 = vmatprep.subr.bf16.mxu0 0
  %490 = vmatpush1.bf16.msra.mxu0 0
  %491 = vmatprep.subr.bf16.mxu0 0
  %492 = vmatpush1.bf16.msra.mxu0 0
  %493 = vmatprep.subr.bf16.mxu0 0
  %494 = vmatpush1.bf16.msra.mxu0 0
  %495 = vmatprep.subr.bf16.mxu0 0
  %496 = vmatpush1.bf16.msra.mxu0 0
  %497 = vmatprep.subr.bf16.mxu0 0
  %498 = vmatpush1.bf16.msra.mxu0 0
  %499 = vmatprep.subr.bf16.mxu0 0
  %500 = vmatpush1.bf16.msra.mxu0 0
  %501 = vmatprep.subr.bf16.mxu0 0
  %502 = vmatpush1.bf16.msra.mxu0 0
  %503 = vmatprep.subr.bf16.mxu0 0
  %504 = vmatpush1.bf16.msra.mxu0 0
  %505 = vmatprep.subr.bf16.mxu0 0
  %506 = vmatpush1.bf16.msra.mxu0 0
  %507 = vmatprep.mubr.bf16.mxu0 0
  %508 = vmatmul.mubr.bf16.gmra.mrb[0].mxu0 %v473
  %v509 = vpop.f32.mrb[0].mxu0
  %v510 = vadd.f32 0.0, %v509
  %v511 = vpop.f32.mrb[0].mxu0
  %v512 = vadd.f32 0.0, %v511
  %v513 = vpop.f32.mrb[0].mxu0
  %v514 = vpop.f32.mrb[0].mxu0
  %515 = vdwg.mxu0
  %v516 = vadd.f32 %v510, %v113
  %v517 = vxor.u32 %v516, 2147483648
  %v518 = vmul.f32 %v517, 1.442695
  %v519 = vpow.pop %v518
  %v520 = vadd.f32 %v519, 1.0
  %v521 = vrcp.pop %v520
  %v522 = vmul.f32 1.0, %v521
  %v523 = vtanh.pop %v516
  %v524 = vmul.f32 %v522, %v430
  %526 = vrot.lane.b32.xlu0 %v523, 64
  %v527 = vpop.permute.xlu0 %526
  %v529 = vmul.f32 %v522, %v527
  %531 = vrot.lane.b32.xlu0 %v529, 32
  %v532 = vpop.permute.xlu0 %531
  %v534 = vadd.f32 %v524, %v532
  %v535 = vtanh.pop %v534
  %537 = vrot.lane.b32.xlu0 %v535, 64
  %v538 = vpop.permute.xlu0 %537
  %v540 = vmul.f32 %v522, %v538
  %v541 = vadd.f32 %v512, %v145
  %v542 = vxor.u32 %v541, 2147483648
  %v543 = vmul.f32 %v542, 1.442695
  %v544 = vpow.pop %v543
  %v545 = vadd.f32 %v544, 1.0
  %v546 = vrcp.pop %v545
  %v547 = vmul.f32 1.0, %v546
  %v548 = vtanh.pop %v541
  %v549 = vmul.f32 %v547, %v455
  %551 = vrot.lane.b32.xlu0 %v548, 64
  %v552 = vpop.permute.xlu0 %551
  %v554 = vmul.f32 %v547, %v552
  %556 = vrot.lane.b32.xlu0 %v554, 32
  %v557 = vpop.permute.xlu0 %556
  %v559 = vadd.f32 %v549, %v557
  %v560 = vtanh.pop %v559
  %562 = vrot.lane.b32.xlu0 %v560, 64
  %v563 = vpop.permute.xlu0 %562
  %v565 = vmul.f32 %v547, %v563
  %567 = vrot.lane.b32.xlu0 %v540, 32
  %v568 = vpop.permute.xlu0 %567
  %571 = vrot.lane.b32.xlu0 %v565, 64
  %v572 = vpop.permute.xlu0 %571
  %v574 = vsel %vm261, %v568, %v572
  %v575 = vpack.c.bf16 %v574, %v574
  %v577 = vsel %vm188, %v575, 0
  %579 = vmatprep.subr.bf16.mxu0 %v173
  %580 = vmatpush1.bf16.msra.mxu0 %v172
  %581 = vmatprep.subr.bf16.mxu0 %v175
  %582 = vmatpush1.bf16.msra.mxu0 %v174
  %583 = vmatprep.subr.bf16.mxu0 %v177
  %584 = vmatpush1.bf16.msra.mxu0 %v176
  %585 = vmatprep.subr.bf16.mxu0 %v179
  %586 = vmatpush1.bf16.msra.mxu0 %v178
  %587 = vmatprep.subr.bf16.mxu0 0
  %588 = vmatpush1.bf16.msra.mxu0 0
  %589 = vmatprep.subr.bf16.mxu0 0
  %590 = vmatpush1.bf16.msra.mxu0 0
  %591 = vmatprep.subr.bf16.mxu0 0
  %592 = vmatpush1.bf16.msra.mxu0 0
  %593 = vmatprep.subr.bf16.mxu0 0
  %594 = vmatpush1.bf16.msra.mxu0 0
  %595 = vmatprep.subr.bf16.mxu0 0
  %596 = vmatpush1.bf16.msra.mxu0 0
  %597 = vmatprep.subr.bf16.mxu0 0
  %598 = vmatpush1.bf16.msra.mxu0 0
  %599 = vmatprep.subr.bf16.mxu0 0
  %600 = vmatpush1.bf16.msra.mxu0 0
  %601 = vmatprep.subr.bf16.mxu0 0
  %602 = vmatpush1.bf16.msra.mxu0 0
  %603 = vmatprep.subr.bf16.mxu0 0
  %604 = vmatpush1.bf16.msra.mxu0 0
  %605 = vmatprep.subr.bf16.mxu0 0
  %606 = vmatpush1.bf16.msra.mxu0 0
  %607 = vmatprep.subr.bf16.mxu0 0
  %608 = vmatpush1.bf16.msra.mxu0 0
  %609 = vmatprep.subr.bf16.mxu0 0
  %610 = vmatpush1.bf16.msra.mxu0 0
  %611 = vmatprep.mubr.bf16.mxu0 0
  %612 = vmatmul.mubr.bf16.gmra.mrb[0].mxu0 %v577
  %v613 = vpop.f32.mrb[0].mxu0
  %v614 = vadd.f32 0.0, %v613
  %v615 = vpop.f32.mrb[0].mxu0
  %v616 = vadd.f32 0.0, %v615
  %v617 = vpop.f32.mrb[0].mxu0
  %v618 = vpop.f32.mrb[0].mxu0
  %619 = vdwg.mxu0
  %v620 = vadd.f32 %v614, %v118
  %v621 = vxor.u32 %v620, 2147483648
  %v622 = vmul.f32 %v621, 1.442695
  %v623 = vpow.pop %v622
  %v624 = vadd.f32 %v623, 1.0
  %v625 = vrcp.pop %v624
  %v626 = vmul.f32 1.0, %v625
  %v627 = vtanh.pop %v620
  %v628 = vmul.f32 %v626, %v534
  %630 = vrot.lane.b32.xlu0 %v627, 64
  %v631 = vpop.permute.xlu0 %630
  %v633 = vmul.f32 %v626, %v631
  %635 = vrot.lane.b32.xlu0 %v633, 32
  %v636 = vpop.permute.xlu0 %635
  %v638 = vadd.f32 %v628, %v636
  %v639 = vtanh.pop %v638
  %641 = vrot.lane.b32.xlu0 %v639, 64
  %v642 = vpop.permute.xlu0 %641
  %v644 = vmul.f32 %v626, %v642
  %v645 = vadd.f32 %v616, %v145
  %v646 = vxor.u32 %v645, 2147483648
  %v647 = vmul.f32 %v646, 1.442695
  %v648 = vpow.pop %v647
  %v649 = vadd.f32 %v648, 1.0
  %v650 = vrcp.pop %v649
  %v651 = vmul.f32 1.0, %v650
  %v652 = vtanh.pop %v645
  %v653 = vmul.f32 %v651, %v559
  %655 = vrot.lane.b32.xlu0 %v652, 64
  %v656 = vpop.permute.xlu0 %655
  %v658 = vmul.f32 %v651, %v656
  %660 = vrot.lane.b32.xlu0 %v658, 32
  %v661 = vpop.permute.xlu0 %660
  %v663 = vadd.f32 %v653, %v661
  %v664 = vtanh.pop %v663
  %666 = vrot.lane.b32.xlu0 %v664, 64
  %v667 = vpop.permute.xlu0 %666
  %v669 = vmul.f32 %v651, %v667
  %671 = vrot.lane.b32.xlu0 %v644, 32
  %v672 = vpop.permute.xlu0 %671
  %675 = vrot.lane.b32.xlu0 %v669, 64
  %v676 = vpop.permute.xlu0 %675
  %v678 = vsel %vm261, %v672, %v676
  %v679 = vpack.c.bf16 %v678, %v678
  %v681 = vsel %vm188, %v679, 0
  %683 = vmatprep.subr.bf16.mxu0 %v173
  %684 = vmatpush1.bf16.msra.mxu0 %v172
  %685 = vmatprep.subr.bf16.mxu0 %v175
  %686 = vmatpush1.bf16.msra.mxu0 %v174
  %687 = vmatprep.subr.bf16.mxu0 %v177
  %688 = vmatpush1.bf16.msra.mxu0 %v176
  %689 = vmatprep.subr.bf16.mxu0 %v179
  %690 = vmatpush1.bf16.msra.mxu0 %v178
  %691 = vmatprep.subr.bf16.mxu0 0
  %692 = vmatpush1.bf16.msra.mxu0 0
  %693 = vmatprep.subr.bf16.mxu0 0
  %694 = vmatpush1.bf16.msra.mxu0 0
  %695 = vmatprep.subr.bf16.mxu0 0
  %696 = vmatpush1.bf16.msra.mxu0 0
  %697 = vmatprep.subr.bf16.mxu0 0
  %698 = vmatpush1.bf16.msra.mxu0 0
  %699 = vmatprep.subr.bf16.mxu0 0
  %700 = vmatpush1.bf16.msra.mxu0 0
  %701 = vmatprep.subr.bf16.mxu0 0
  %702 = vmatpush1.bf16.msra.mxu0 0
  %703 = vmatprep.subr.bf16.mxu0 0
  %704 = vmatpush1.bf16.msra.mxu0 0
  %705 = vmatprep.subr.bf16.mxu0 0
  %706 = vmatpush1.bf16.msra.mxu0 0
  %707 = vmatprep.subr.bf16.mxu0 0
  %708 = vmatpush1.bf16.msra.mxu0 0
  %709 = vmatprep.subr.bf16.mxu0 0
  %710 = vmatpush1.bf16.msra.mxu0 0
  %711 = vmatprep.subr.bf16.mxu0 0
  %712 = vmatpush1.bf16.msra.mxu0 0
  %713 = vmatprep.subr.bf16.mxu0 0
  %714 = vmatpush1.bf16.msra.mxu0 0
  %715 = vmatprep.mubr.bf16.mxu0 0
  %716 = vmatmul.mubr.bf16.gmra.mrb[0].mxu0 %v681
  %v717 = vpop.f32.mrb[0].mxu0
  %v718 = vadd.f32 0.0, %v717
  %v719 = vpop.f32.mrb[0].mxu0
  %v720 = vadd.f32 0.0, %v719
  %v721 = vpop.f32.mrb[0].mxu0
  %v722 = vpop.f32.mrb[0].mxu0
  %723 = vdwg.mxu0
  %v724 = vadd.f32 %v718, %v121
  %v725 = vxor.u32 %v724, 2147483648
  %v726 = vmul.f32 %v725, 1.442695
  %v727 = vpow.pop %v726
  %v728 = vadd.f32 %v727, 1.0
  %v729 = vrcp.pop %v728
  %v730 = vmul.f32 1.0, %v729
  %v731 = vtanh.pop %v724
  %v732 = vmul.f32 %v730, %v638
  %734 = vrot.lane.b32.xlu0 %v731, 64
  %v735 = vpop.permute.xlu0 %734
  %v737 = vmul.f32 %v730, %v735
  %739 = vrot.lane.b32.xlu0 %v737, 32
  %v740 = vpop.permute.xlu0 %739
  %v742 = vadd.f32 %v732, %v740
  %v743 = vtanh.pop %v742
  %745 = vrot.lane.b32.xlu0 %v743, 64
  %v746 = vpop.permute.xlu0 %745
  %v748 = vmul.f32 %v730, %v746
  %v749 = vadd.f32 %v720, %v145
  %v750 = vxor.u32 %v749, 2147483648
  %v751 = vmul.f32 %v750, 1.442695
  %v752 = vpow.pop %v751
  %v753 = vadd.f32 %v752, 1.0
  %v754 = vrcp.pop %v753
  %v755 = vmul.f32 1.0, %v754
  %v756 = vtanh.pop %v749
  %v757 = vmul.f32 %v755, %v663
  %759 = vrot.lane.b32.xlu0 %v756, 64
  %v760 = vpop.permute.xlu0 %759
  %v762 = vmul.f32 %v755, %v760
  %764 = vrot.lane.b32.xlu0 %v762, 32
  %v765 = vpop.permute.xlu0 %764
  %v767 = vadd.f32 %v757, %v765
  %v768 = vtanh.pop %v767
  %770 = vrot.lane.b32.xlu0 %v768, 64
  %v771 = vpop.permute.xlu0 %770
  %v773 = vmul.f32 %v755, %v771
  %775 = vrot.lane.b32.xlu0 %v748, 32
  %v776 = vpop.permute.xlu0 %775
  %779 = vrot.lane.b32.xlu0 %v773, 64
  %v780 = vpop.permute.xlu0 %779
  %v782 = vsel %vm261, %v776, %v780
  %v783 = vpack.c.bf16 %v782, %v782
  %v785 = vsel %vm188, %v783, 0
  %787 = vmatprep.subr.bf16.mxu0 %v173
  %788 = vmatpush1.bf16.msra.mxu0 %v172
  %789 = vmatprep.subr.bf16.mxu0 %v175
  %790 = vmatpush1.bf16.msra.mxu0 %v174
  %791 = vmatprep.subr.bf16.mxu0 %v177
  %792 = vmatpush1.bf16.msra.mxu0 %v176
  %793 = vmatprep.subr.bf16.mxu0 %v179
  %794 = vmatpush1.bf16.msra.mxu0 %v178
  %795 = vmatprep.subr.bf16.mxu0 0
  %796 = vmatpush1.bf16.msra.mxu0 0
  %797 = vmatprep.subr.bf16.mxu0 0
  %798 = vmatpush1.bf16.msra.mxu0 0
  %799 = vmatprep.subr.bf16.mxu0 0
  %800 = vmatpush1.bf16.msra.mxu0 0
  %801 = vmatprep.subr.bf16.mxu0 0
  %802 = vmatpush1.bf16.msra.mxu0 0
  %803 = vmatprep.subr.bf16.mxu0 0
  %804 = vmatpush1.bf16.msra.mxu0 0
  %805 = vmatprep.subr.bf16.mxu0 0
  %806 = vmatpush1.bf16.msra.mxu0 0
  %807 = vmatprep.subr.bf16.mxu0 0
  %808 = vmatpush1.bf16.msra.mxu0 0
  %809 = vmatprep.subr.bf16.mxu0 0
  %810 = vmatpush1.bf16.msra.mxu0 0
  %811 = vmatprep.subr.bf16.mxu0 0
  %812 = vmatpush1.bf16.msra.mxu0 0
  %813 = vmatprep.subr.bf16.mxu0 0
  %814 = vmatpush1.bf16.msra.mxu0 0
  %815 = vmatprep.subr.bf16.mxu0 0
  %816 = vmatpush1.bf16.msra.mxu0 0
  %817 = vmatprep.subr.bf16.mxu0 0
  %818 = vmatpush1.bf16.msra.mxu0 0
  %819 = vmatprep.mubr.bf16.mxu0 0
  %820 = vmatmul.mubr.bf16.gmra.mrb[0].mxu0 %v785
  %v821 = vpop.f32.mrb[0].mxu0
  %v822 = vadd.f32 0.0, %v821
  %v823 = vpop.f32.mrb[0].mxu0
  %v824 = vadd.f32 0.0, %v823
  %v825 = vpop.f32.mrb[0].mxu0
  %v826 = vpop.f32.mrb[0].mxu0
  %827 = vdwg.mxu0
  %v828 = vadd.f32 %v822, %v126
  %v829 = vxor.u32 %v828, 2147483648
  %v830 = vmul.f32 %v829, 1.442695
  %v831 = vpow.pop %v830
  %v832 = vadd.f32 %v831, 1.0
  %v833 = vrcp.pop %v832
  %v834 = vmul.f32 1.0, %v833
  %v835 = vtanh.pop %v828
  %v836 = vmul.f32 %v834, %v742
  %838 = vrot.lane.b32.xlu0 %v835, 64
  %v839 = vpop.permute.xlu0 %838
  %v841 = vmul.f32 %v834, %v839
  %843 = vrot.lane.b32.xlu0 %v841, 32
  %v844 = vpop.permute.xlu0 %843
  %v846 = vadd.f32 %v836, %v844
  %v847 = vtanh.pop %v846
  %849 = vrot.lane.b32.xlu0 %v847, 64
  %v850 = vpop.permute.xlu0 %849
  %v852 = vmul.f32 %v834, %v850
  %v853 = vadd.f32 %v824, %v145
  %v854 = vxor.u32 %v853, 2147483648
  %v855 = vmul.f32 %v854, 1.442695
  %v856 = vpow.pop %v855
  %v857 = vadd.f32 %v856, 1.0
  %v858 = vrcp.pop %v857
  %v859 = vmul.f32 1.0, %v858
  %v860 = vtanh.pop %v853
  %v861 = vmul.f32 %v859, %v767
  %863 = vrot.lane.b32.xlu0 %v860, 64
  %v864 = vpop.permute.xlu0 %863
  %v866 = vmul.f32 %v859, %v864
  %868 = vrot.lane.b32.xlu0 %v866, 32
  %v869 = vpop.permute.xlu0 %868
  %v871 = vadd.f32 %v861, %v869
  %v872 = vtanh.pop %v871
  %874 = vrot.lane.b32.xlu0 %v872, 64
  %v875 = vpop.permute.xlu0 %874
  %v877 = vmul.f32 %v859, %v875
  %879 = vrot.lane.b32.xlu0 %v852, 32
  %v880 = vpop.permute.xlu0 %879
  %883 = vrot.lane.b32.xlu0 %v877, 64
  %v884 = vpop.permute.xlu0 %883
  %v886 = vsel %vm261, %v880, %v884
  %v887 = vpack.c.bf16 %v886, %v886
  %v889 = vsel %vm188, %v887, 0
  %891 = vmatprep.subr.bf16.mxu0 %v173
  %892 = vmatpush1.bf16.msra.mxu0 %v172
  %893 = vmatprep.subr.bf16.mxu0 %v175
  %894 = vmatpush1.bf16.msra.mxu0 %v174
  %895 = vmatprep.subr.bf16.mxu0 %v177
  %896 = vmatpush1.bf16.msra.mxu0 %v176
  %897 = vmatprep.subr.bf16.mxu0 %v179
  %898 = vmatpush1.bf16.msra.mxu0 %v178
  %899 = vmatprep.subr.bf16.mxu0 0
  %900 = vmatpush1.bf16.msra.mxu0 0
  %901 = vmatprep.subr.bf16.mxu0 0
  %902 = vmatpush1.bf16.msra.mxu0 0
  %903 = vmatprep.subr.bf16.mxu0 0
  %904 = vmatpush1.bf16.msra.mxu0 0
  %905 = vmatprep.subr.bf16.mxu0 0
  %906 = vmatpush1.bf16.msra.mxu0 0
  %907 = vmatprep.subr.bf16.mxu0 0
  %908 = vmatpush1.bf16.msra.mxu0 0
  %909 = vmatprep.subr.bf16.mxu0 0
  %910 = vmatpush1.bf16.msra.mxu0 0
  %911 = vmatprep.subr.bf16.mxu0 0
  %912 = vmatpush1.bf16.msra.mxu0 0
  %913 = vmatprep.subr.bf16.mxu0 0
  %914 = vmatpush1.bf16.msra.mxu0 0
  %915 = vmatprep.subr.bf16.mxu0 0
  %916 = vmatpush1.bf16.msra.mxu0 0
  %917 = vmatprep.subr.bf16.mxu0 0
  %918 = vmatpush1.bf16.msra.mxu0 0
  %919 = vmatprep.subr.bf16.mxu0 0
  %920 = vmatpush1.bf16.msra.mxu0 0
  %921 = vmatprep.subr.bf16.mxu0 0
  %922 = vmatpush1.bf16.msra.mxu0 0
  %923 = vmatprep.mubr.bf16.mxu0 0
  %924 = vmatmul.mubr.bf16.gmra.mrb[0].mxu0 %v889
  %v925 = vpop.f32.mrb[0].mxu0
  %v926 = vadd.f32 0.0, %v925
  %v927 = vpop.f32.mrb[0].mxu0
  %v928 = vadd.f32 0.0, %v927
  %v929 = vpop.f32.mrb[0].mxu0
  %v930 = vpop.f32.mrb[0].mxu0
  %931 = vdwg.mxu0
  %v932 = vadd.f32 %v926, %v129
  %v933 = vxor.u32 %v932, 2147483648
  %v934 = vmul.f32 %v933, 1.442695
  %v935 = vpow.pop %v934
  %v936 = vadd.f32 %v935, 1.0
  %v937 = vrcp.pop %v936
  %v938 = vmul.f32 1.0, %v937
  %v939 = vtanh.pop %v932
  %v940 = vmul.f32 %v938, %v846
  %942 = vrot.lane.b32.xlu0 %v939, 64
  %v943 = vpop.permute.xlu0 %942
  %v945 = vmul.f32 %v938, %v943
  %947 = vrot.lane.b32.xlu0 %v945, 32
  %v948 = vpop.permute.xlu0 %947
  %v950 = vadd.f32 %v940, %v948
  %v951 = vtanh.pop %v950
  %953 = vrot.lane.b32.xlu0 %v951, 64
  %v954 = vpop.permute.xlu0 %953
  %v956 = vmul.f32 %v938, %v954
  %v957 = vadd.f32 %v928, %v145
  %v958 = vxor.u32 %v957, 2147483648
  %v959 = vmul.f32 %v958, 1.442695
  %v960 = vpow.pop %v959
  %v961 = vadd.f32 %v960, 1.0
  %v962 = vrcp.pop %v961
  %v963 = vmul.f32 1.0, %v962
  %v964 = vtanh.pop %v957
  %v965 = vmul.f32 %v963, %v871
  %967 = vrot.lane.b32.xlu0 %v964, 64
  %v968 = vpop.permute.xlu0 %967
  %v970 = vmul.f32 %v963, %v968
  %972 = vrot.lane.b32.xlu0 %v970, 32
  %v973 = vpop.permute.xlu0 %972
  %v975 = vadd.f32 %v965, %v973
  %v976 = vtanh.pop %v975
  %978 = vrot.lane.b32.xlu0 %v976, 64
  %v979 = vpop.permute.xlu0 %978
  %v981 = vmul.f32 %v963, %v979
  %983 = vrot.lane.b32.xlu0 %v956, 32
  %v984 = vpop.permute.xlu0 %983
  %987 = vrot.lane.b32.xlu0 %v981, 64
  %v988 = vpop.permute.xlu0 %987
  %v990 = vsel %vm261, %v984, %v988
  %v991 = vpack.c.bf16 %v990, %v990
  %v993 = vsel %vm188, %v991, 0
  %995 = vmatprep.subr.bf16.mxu0 %v173
  %996 = vmatpush1.bf16.msra.mxu0 %v172
  %997 = vmatprep.subr.bf16.mxu0 %v175
  %998 = vmatpush1.bf16.msra.mxu0 %v174
  %999 = vmatprep.subr.bf16.mxu0 %v177
  %1000 = vmatpush1.bf16.msra.mxu0 %v176
  %1001 = vmatprep.subr.bf16.mxu0 %v179
  %1002 = vmatpush1.bf16.msra.mxu0 %v178
  %1003 = vmatprep.subr.bf16.mxu0 0
  %1004 = vmatpush1.bf16.msra.mxu0 0
  %1005 = vmatprep.subr.bf16.mxu0 0
  %1006 = vmatpush1.bf16.msra.mxu0 0
  %1007 = vmatprep.subr.bf16.mxu0 0
  %1008 = vmatpush1.bf16.msra.mxu0 0
  %1009 = vmatprep.subr.bf16.mxu0 0
  %1010 = vmatpush1.bf16.msra.mxu0 0
  %1011 = vmatprep.subr.bf16.mxu0 0
  %1012 = vmatpush1.bf16.msra.mxu0 0
  %1013 = vmatprep.subr.bf16.mxu0 0
  %1014 = vmatpush1.bf16.msra.mxu0 0
  %1015 = vmatprep.subr.bf16.mxu0 0
  %1016 = vmatpush1.bf16.msra.mxu0 0
  %1017 = vmatprep.subr.bf16.mxu0 0
  %1018 = vmatpush1.bf16.msra.mxu0 0
  %1019 = vmatprep.subr.bf16.mxu0 0
  %1020 = vmatpush1.bf16.msra.mxu0 0
  %1021 = vmatprep.subr.bf16.mxu0 0
  %1022 = vmatpush1.bf16.msra.mxu0 0
  %1023 = vmatprep.subr.bf16.mxu0 0
  %1024 = vmatpush1.bf16.msra.mxu0 0
  %1025 = vmatprep.subr.bf16.mxu0 0
  %1026 = vmatpush1.bf16.msra.mxu0 0
  %1027 = vmatprep.mubr.bf16.mxu0 0
  %1028 = vmatmul.mubr.bf16.gmra.mrb[0].mxu0 %v993
  %v1029 = vpop.f32.mrb[0].mxu0
  %v1030 = vpop.f32.mrb[0].mxu0
  %v1031 = vadd.f32 0.0, %v1030
  %v1032 = vpop.f32.mrb[0].mxu0
  %v1033 = vpop.f32.mrb[0].mxu0
  %1034 = vdwg.mxu0
  %v1035 = vadd.f32 %v1031, %v145
  %v1036 = vxor.u32 %v1035, 2147483648
  %v1037 = vmul.f32 %v1036, 1.442695
  %v1038 = vpow.pop %v1037
  %v1039 = vadd.f32 %v1038, 1.0
  %v1040 = vrcp.pop %v1039
  %v1041 = vmul.f32 1.0, %v1040
  %v1042 = vtanh.pop %v1035
  %v1043 = vmul.f32 %v1041, %v975
  %1045 = vrot.lane.b32.xlu0 %v1042, 64
  %v1046 = vpop.permute.xlu0 %1045
  %v1048 = vmul.f32 %v1041, %v1046
  %1050 = vrot.lane.b32.xlu0 %v1048, 32
  %v1051 = vpop.permute.xlu0 %1050
  %v1053 = vadd.f32 %v1043, %v1051
  %v1054 = vtanh.pop %v1053
  %1056 = vrot.lane.b32.xlu0 %v1054, 64
  %v1057 = vpop.permute.xlu0 %1056
  %v1059 = vmul.f32 %v1041, %v1057
  %v1060 = vpack.c.bf16 %v1059, %v1059
  %v1061 = vld [vmem:[%s5] sm:$0xf]
  %v1062 = vld [vmem:[%s5 + $0x4] sm:$0xf]
  %v1063 = vld [vmem:[%s5 + $0x8] sm:$0xf]
  %v1064 = vld [vmem:[%s5 + $0xc] sm:$0xf]
  %v1065 = vld [vmem:[%s6] sm:$0x1]
  %v1067 = vlaneseq
  %v1068 = vshrl.u32 %v1067, 7
  %v1069 = vsub.s32 0, %v1068
  %v1070 = vrot.slane %v1065, %v1069
  %1073 = vrot.lane.b32.xlu0 %v1060, 32
  %v1074 = vpop.permute.xlu0 %1073
  %v1079 = vunpack.c.l.b16 %v1061
  %v1080 = vunpack.c.l.b16 %v1062
  %v1081 = vunpack.c.l.b16 %v1063
  %v1082 = vunpack.c.l.b16 %v1064
  %v1083 = vpack.c.b16 %v1080, %v1079
  %v1084 = vpack.c.b16 %v1082, %v1081
  %v1088 = vsel %vm261, %v1074, 0
  %1090 = vmatprep.subr.bf16.mxu0 0
  %1091 = vmatpush1.bf16.msra.mxu0 %v1083
  %1092 = vmatprep.subr.bf16.mxu0 0
  %1093 = vmatpush1.bf16.msra.mxu0 %v1084
  %1094 = vmatprep.subr.bf16.mxu0 0
  %1095 = vmatpush1.bf16.msra.mxu0 0
  %1096 = vmatprep.subr.bf16.mxu0 0
  %1097 = vmatpush1.bf16.msra.mxu0 0
  %1098 = vmatprep.subr.bf16.mxu0 0
  %1099 = vmatpush1.bf16.msra.mxu0 0
  %1100 = vmatprep.subr.bf16.mxu0 0
  %1101 = vmatpush1.bf16.msra.mxu0 0
  %1102 = vmatprep.subr.bf16.mxu0 0
  %1103 = vmatpush1.bf16.msra.mxu0 0
  %1104 = vmatprep.subr.bf16.mxu0 0
  %1105 = vmatpush1.bf16.msra.mxu0 0
  %1106 = vmatprep.subr.bf16.mxu0 0
  %1107 = vmatpush1.bf16.msra.mxu0 0
  %1108 = vmatprep.subr.bf16.mxu0 0
  %1109 = vmatpush1.bf16.msra.mxu0 0
  %1110 = vmatprep.subr.bf16.mxu0 0
  %1111 = vmatpush1.bf16.msra.mxu0 0
  %1112 = vmatprep.subr.bf16.mxu0 0
  %1113 = vmatpush1.bf16.msra.mxu0 0
  %1114 = vmatprep.subr.bf16.mxu0 0
  %1115 = vmatpush1.bf16.msra.mxu0 0
  %1116 = vmatprep.subr.bf16.mxu0 0
  %1117 = vmatpush1.bf16.msra.mxu0 0
  %1118 = vmatprep.subr.bf16.mxu0 0
  %1119 = vmatpush1.bf16.msra.mxu0 0
  %1120 = vmatprep.subr.bf16.mxu0 0
  %1121 = vmatpush1.bf16.msra.mxu0 0
  %1122 = vmatprep.mubr.bf16.mxu0 0
  %1123 = vmatmul.mubr.bf16.gmra.mrb[0].mxu0 %v1088
  %v1124 = vpop.f32.mrb[0].mxu0
  %v1125 = vadd.f32 %v1070, %v1124
  %v1126 = vpop.f32.mrb[0].mxu0
  %v1127 = vpop.f32.mrb[0].mxu0
  %v1128 = vpop.f32.mrb[0].mxu0
  %1129 = vdwg.mxu0
  %vm1130 = vcmask 64512
  %1131 = vst.msk [vmem:[%s7] sm:$0xff] %vm1130, %v1125
  // Predicated region
  $region30: #{simple_lstm_forward.1} parent=0 // pred_check
    _
  $region31: #{simple_lstm_forward.1} parent=0 // pred_check_branch
    %1133 = sbr.rel (0) target = $region33
  $region32: #{simple_lstm_forward.1} parent=0 // pred_region
    _
  $region33: #{simple_lstm_forward.1} parent=0 // pred_fallthru
    _
  // Predicated region
  $region34: #{simple_lstm_forward.1} parent=0 // pred_check
    _
  $region35: #{simple_lstm_forward.1} parent=0 // pred_check_branch
    %1135 = sbr.rel (0) target = $region37
  $region36: #{simple_lstm_forward.1} parent=0 // pred_region
    _
  $region37: #{simple_lstm_forward.1} parent=0 // pred_fallthru
    _

</llo_original>
